<compile_context>
chip_gen: v7x
topology: tpu7x:2x2x1
jax: 0.10.0
libtpu: 0.0.40
codegen_flags: <defaults>
</compile_context>

<pallas_src>
import functools

import jax
import jax.numpy as jnp
from jax.experimental import pallas as pl
from jax.experimental.pallas import tpu as pltpu

NEG_SLOPE = 0.01  # F.leaky_relu default negative_slope
LANE = 128


def _round_up(x, m):
    return ((x + m - 1) // m) * m


def _conv_leakyrelu_kernel(x_ref, w_ref, o_ref, *, KH, KW, row_stride, TM):
    # x_ref : (1, 1, L, Cin_pad)        bf16  -- halo slab for this (batch, row-tile)
    # w_ref : (KH*KW*Cin_pad, Cpad)     bf16  -- resident weights (constant index map)
    # o_ref : (1, 1, TM, Cpad)          out dtype (lane-dense: Cpad % 128 == 0)
    #
    # All slice starts are static Python ints (the row-tile offset is handled by the
    # BlockSpec), so the shifted views are plain static slices of the VMEM slab.
    pieces = []
    for kh in range(KH):
        for kw in range(KW):
            start = kh * row_stride + kw
            pieces.append(x_ref[0, 0, start:start + TM, :])        # (TM, Cin_pad)
    lhs = jnp.concatenate(pieces, axis=-1)                          # (TM, KH*KW*Cin_pad)
    acc = jnp.dot(lhs, w_ref[...], preferred_element_type=jnp.float32)  # single MXU pass
    o_ref[0, 0] = jnp.where(acc >= 0, acc, NEG_SLOPE * acc).astype(o_ref.dtype)


def _generation_params():
    """Per-TPU-generation tile target / VMEM limit, with a conservative fallback."""
    tm_target, vmem_limit = 512, 32 * 1024 * 1024
    try:
        cap = pltpu.get_tpu_info().vmem_capacity_bytes
        if cap >= 100 * 1024 * 1024:            # v5e / v6e: 128 MiB VMEM
            tm_target, vmem_limit = 1024, 96 * 1024 * 1024
        else:                                   # v7x: 64 MiB per TensorCore
            tm_target, vmem_limit = 640, 48 * 1024 * 1024
    except Exception:
        pass
    return tm_target, vmem_limit


def basic_conv2d(x, weight, padding, *, tm_target=None):
    """Conv2d(bias=False, stride=1, padding=padding) + leaky_relu(0.01); NCHW in/out."""
    N, Cin, H, W = x.shape
    Cout, Cin_w, KH, KW = weight.shape
    assert Cin == Cin_w
    pad = padding

    Hout = H + 2 * pad - KH + 1
    Wout = W + 2 * pad - KW + 1
    assert Hout > 0 and Wout > 0

    gen_tm, vmem_limit = _generation_params()
    if tm_target is None:
        tm_target = gen_tm

    # --- tiling geometry (tiny wrapper-side padding only, sliced off afterwards) ---
    Wp_pad = _round_up(max(W + 2 * pad, 8), 8)          # padded row width == row stride
    R = max(1, min(Hout, -(-tm_target // Wp_pad)))      # output image rows per grid step
    n_row_tiles = -(-Hout // R)
    if N * n_row_tiles < 2 and Hout >= 2:               # v7x: keep >= 2 parallel grid steps
        R = -(-Hout // 2)
        n_row_tiles = -(-Hout // R)
    if (R * Wp_pad) % 16:                               # keep TM 16-aligned (packed dtypes)
        R += 1
        n_row_tiles = -(-Hout // R)
    TM = R * Wp_pad                                     # flattened output rows per grid step
    Hout_p = n_row_tiles * R
    Rslab = R + KH - 1                                  # image rows per slab (incl. halo)
    Hp_total = Hout_p + KH - 1
    tail = _round_up(KW - 1, 8) if KW > 1 else 0        # slack for the kw shifts
    L = Rslab * Wp_pad + tail                           # flat slab length

    Cin_pad = _round_up(Cin, 8)
    Cpad = _round_up(Cout, LANE)                        # lane-dense output channels
    K = KH * KW * Cin_pad                               # folded contraction depth

    # Static OOB guard for the in-kernel shifted views (Pallas does not bounds-check VMEM).
    assert (KH - 1) * Wp_pad + (KW - 1) + TM <= L

    # --- input prep (XLA glue): NCHW -> padded NHWC -> per-(batch,row-tile) halo slabs ---
    x_nhwc = jnp.transpose(x.astype(jnp.bfloat16), (0, 2, 3, 1))
    xp = jnp.pad(x_nhwc, ((0, 0),
                          (pad, Hp_total - H - pad),
                          (pad, Wp_pad - W - pad),
                          (0, Cin_pad - Cin)))
    row_idx = (jnp.arange(n_row_tiles)[:, None] * R
               + jnp.arange(Rslab)[None, :])            # (T, Rslab), halo rows duplicated
    xslabs = jnp.take(xp, row_idx, axis=1)              # (N, T, Rslab, Wp_pad, Cin_pad)
    xslabs = xslabs.reshape(N, n_row_tiles, Rslab * Wp_pad, Cin_pad)
    if tail:
        xslabs = jnp.pad(xslabs, ((0, 0), (0, 0), (0, tail), (0, 0)))

    # weight (Cout, Cin, KH, KW) -> (KH, KW, Cin_pad, Cpad) -> (KH*KW*Cin_pad, Cpad), bf16
    w = jnp.transpose(weight.astype(jnp.bfloat16), (2, 3, 1, 0))
    w = jnp.pad(w, ((0, 0), (0, 0), (0, Cin_pad - Cin), (0, Cpad - Cout)))
    w2 = w.reshape(K, Cpad)

    kernel = functools.partial(_conv_leakyrelu_kernel, KH=KH, KW=KW,
                               row_stride=Wp_pad, TM=TM)

    out_dtype = x.dtype
    cost = pl.CostEstimate(
        flops=2 * N * n_row_tiles * TM * K * Cpad,
        transcendentals=0,
        bytes_accessed=int(xslabs.size * 2 + w2.size * 2
                           + N * n_row_tiles * TM * Cpad
                           * jnp.dtype(out_dtype).itemsize),
    )

    out_tiles = pl.pallas_call(
        kernel,
        out_shape=jax.ShapeDtypeStruct((N, n_row_tiles, TM, Cpad), out_dtype),
        grid_spec=pltpu.PrefetchScalarGridSpec(
            num_scalar_prefetch=0,
            grid=(N, n_row_tiles),
            in_specs=[
                # one halo slab per (batch, row-tile): streamed, VMEM = O(TM)
                pl.BlockSpec((1, 1, L, Cin_pad), lambda n, t: (n, t, 0, 0)),
                # folded weight matrix, same block every step (resident)
                pl.BlockSpec((K, Cpad), lambda n, t: (0, 0)),
            ],
            out_specs=pl.BlockSpec((1, 1, TM, Cpad), lambda n, t: (n, t, 0, 0)),
        ),
        compiler_params=pltpu.CompilerParams(
            dimension_semantics=("parallel", "parallel"),
            vmem_limit_bytes=vmem_limit,
        ),
        cost_estimate=cost,
    )(xslabs, w2)

    # Un-flatten, drop alignment junk / lane padding, back to NCHW.
    out = out_tiles.reshape(N, Hout_p, Wp_pad, Cpad)[:, :Hout, :Wout, :Cout]
    return jnp.transpose(out, (0, 3, 1, 2))


if __name__ == "__main__":
    # BasicConv2d(in_channels=4, out_channels=8, kernel_size=3, padding=1)
    N, Cin, H, W = 2, 4, 16, 16
    Cout, KH, KW, PAD = 8, 3, 3, 1

    key = jax.random.PRNGKey(0)
    kx, kw_key = jax.random.split(key)
    x = jax.random.normal(kx, (N, Cin, H, W), dtype=jnp.float32)
    weight = jax.random.normal(kw_key, (Cout, Cin, KH, KW), dtype=jnp.float32) * 0.1

    conv = jax.jit(functools.partial(basic_conv2d, padding=PAD))
    out = jax.block_until_ready(conv(x, weight))
    assert out.shape == (N, Cout, H, W)

    # Reference: same bf16-rounded operands, f32 conv + leaky_relu.
    # NOTE: operands are rounded to bf16 before the MXU, so results differ from a pure-f32
    # PyTorch BasicConv2d by ~1e-2 relative; this check verifies the kernel math itself.
    xq = x.astype(jnp.bfloat16).astype(jnp.float32)
    wq = weight.astype(jnp.bfloat16).astype(jnp.float32)
    ref = jax.lax.conv_general_dilated(
        xq, wq, window_strides=(1, 1), padding=((PAD, PAD), (PAD, PAD)),
        dimension_numbers=("NCHW", "OIHW", "NCHW"),
        precision=jax.lax.Precision.HIGHEST)
    ref = jnp.where(ref >= 0, ref, NEG_SLOPE * ref)
    assert jnp.allclose(out, ref, atol=2e-3, rtol=2e-3), "mismatch vs reference"

    print("KERNEL_OK")
</pallas_src>

<mosaic_0001>
module attributes {stable_mosaic.version = 11 : i64} {
  func.func @_conv_leakyrelu_kernel(%arg0: i32, %arg1: i32, %arg2: memref<1x1x440x8xbf16, #tpu.memory_space<vmem>>, %arg3: memref<72x128xbf16, #tpu.memory_space<vmem>>, %arg4: memref<1x1x384x128xf32, #tpu.memory_space<vmem>>) attributes {dimension_semantics = [#tpu.dimension_semantics<parallel>, #tpu.dimension_semantics<parallel>], iteration_bounds = array<i64: 2, 1>, scalar_prefetch = 0 : i64, scratch_operands = 0 : i64, tpu.core_type = #tpu.core_type<tc>, window_params = [{transform_indices = @transform_0, window_bounds = array<i64: 1, 1, 440, 8>}, {pipeline_mode = #tpu.pipeline_mode<synchronous>, transform_indices = @transform_1, window_bounds = array<i64: 72, 128>}, {transform_indices = @transform_2, window_bounds = array<i64: 1, 1, 384, 128>}]} {
    %c0 = arith.constant 0 : index
    %c0_0 = arith.constant 0 : index
    %c0_1 = arith.constant 0 : index
    %c0_2 = arith.constant 0 : index
    %0 = vector.load %arg2[%c0, %c0_0, %c0_1, %c0_2] : memref<1x1x440x8xbf16, #tpu.memory_space<vmem>>, vector<1x1x384x8xbf16>
    %1 = vector.shape_cast %0 : vector<1x1x384x8xbf16> to vector<384x8xbf16>
    %c0_3 = arith.constant 0 : index
    %c0_4 = arith.constant 0 : index
    %c1 = arith.constant 1 : index
    %c0_5 = arith.constant 0 : index
    %2 = vector.load %arg2[%c0_3, %c0_4, %c1, %c0_5] : memref<1x1x440x8xbf16, #tpu.memory_space<vmem>>, vector<1x1x384x8xbf16>
    %3 = vector.shape_cast %2 : vector<1x1x384x8xbf16> to vector<384x8xbf16>
    %c0_6 = arith.constant 0 : index
    %c0_7 = arith.constant 0 : index
    %c2 = arith.constant 2 : index
    %c0_8 = arith.constant 0 : index
    %4 = vector.load %arg2[%c0_6, %c0_7, %c2, %c0_8] : memref<1x1x440x8xbf16, #tpu.memory_space<vmem>>, vector<1x1x384x8xbf16>
    %5 = vector.shape_cast %4 : vector<1x1x384x8xbf16> to vector<384x8xbf16>
    %c0_9 = arith.constant 0 : index
    %c0_10 = arith.constant 0 : index
    %c24 = arith.constant 24 : index
    %c0_11 = arith.constant 0 : index
    %6 = vector.load %arg2[%c0_9, %c0_10, %c24, %c0_11] : memref<1x1x440x8xbf16, #tpu.memory_space<vmem>>, vector<1x1x384x8xbf16>
    %7 = vector.shape_cast %6 : vector<1x1x384x8xbf16> to vector<384x8xbf16>
    %c0_12 = arith.constant 0 : index
    %c0_13 = arith.constant 0 : index
    %c25 = arith.constant 25 : index
    %c0_14 = arith.constant 0 : index
    %8 = vector.load %arg2[%c0_12, %c0_13, %c25, %c0_14] : memref<1x1x440x8xbf16, #tpu.memory_space<vmem>>, vector<1x1x384x8xbf16>
    %9 = vector.shape_cast %8 : vector<1x1x384x8xbf16> to vector<384x8xbf16>
    %c0_15 = arith.constant 0 : index
    %c0_16 = arith.constant 0 : index
    %c26 = arith.constant 26 : index
    %c0_17 = arith.constant 0 : index
    %10 = vector.load %arg2[%c0_15, %c0_16, %c26, %c0_17] : memref<1x1x440x8xbf16, #tpu.memory_space<vmem>>, vector<1x1x384x8xbf16>
    %11 = vector.shape_cast %10 : vector<1x1x384x8xbf16> to vector<384x8xbf16>
    %c0_18 = arith.constant 0 : index
    %c0_19 = arith.constant 0 : index
    %c48 = arith.constant 48 : index
    %c0_20 = arith.constant 0 : index
    %12 = vector.load %arg2[%c0_18, %c0_19, %c48, %c0_20] : memref<1x1x440x8xbf16, #tpu.memory_space<vmem>>, vector<1x1x384x8xbf16>
    %13 = vector.shape_cast %12 : vector<1x1x384x8xbf16> to vector<384x8xbf16>
    %c0_21 = arith.constant 0 : index
    %c0_22 = arith.constant 0 : index
    %c49 = arith.constant 49 : index
    %c0_23 = arith.constant 0 : index
    %14 = vector.load %arg2[%c0_21, %c0_22, %c49, %c0_23] : memref<1x1x440x8xbf16, #tpu.memory_space<vmem>>, vector<1x1x384x8xbf16>
    %15 = vector.shape_cast %14 : vector<1x1x384x8xbf16> to vector<384x8xbf16>
    %c0_24 = arith.constant 0 : index
    %c0_25 = arith.constant 0 : index
    %c50 = arith.constant 50 : index
    %c0_26 = arith.constant 0 : index
    %16 = vector.load %arg2[%c0_24, %c0_25, %c50, %c0_26] : memref<1x1x440x8xbf16, #tpu.memory_space<vmem>>, vector<1x1x384x8xbf16>
    %17 = vector.shape_cast %16 : vector<1x1x384x8xbf16> to vector<384x8xbf16>
    %18 = tpu.concatenate %1, %3, %5, %7, %9, %11, %13, %15, %17 in 1 : vector<384x8xbf16>, vector<384x8xbf16>, vector<384x8xbf16>, vector<384x8xbf16>, vector<384x8xbf16>, vector<384x8xbf16>, vector<384x8xbf16>, vector<384x8xbf16>, vector<384x8xbf16> -> vector<384x72xbf16>
    %c0_27 = arith.constant 0 : index
    %c0_28 = arith.constant 0 : index
    %19 = vector.load %arg3[%c0_27, %c0_28] : memref<72x128xbf16, #tpu.memory_space<vmem>>, vector<72x128xbf16>
    %cst = arith.constant dense<0.000000e+00> : vector<384x128xf32>
    %20 = tpu.matmul %18, %19, %cst {dimension_numbers = #tpu.dot_dimension_numbers<[1], [0], [0], [1], [0, 0, 1, 1], [], []>} : vector<384x72xbf16>, vector<72x128xbf16>, vector<384x128xf32> -> vector<384x128xf32>
    %cst_29 = arith.constant 0.000000e+00 : f32
    %21 = vector.broadcast %cst_29 : f32 to vector<384x128xf32>
    %22 = arith.cmpf oge, %20, %21 : vector<384x128xf32>
    %cst_30 = arith.constant 0.00999999977 : f32
    %23 = vector.broadcast %cst_30 : f32 to vector<384x128xf32>
    %24 = arith.mulf %23, %20 : vector<384x128xf32>
    %25 = arith.select %22, %20, %24 : vector<384x128xi1>, vector<384x128xf32>
    %c0_31 = arith.constant 0 : index
    %c0_32 = arith.constant 0 : index
    %c0_33 = arith.constant 0 : index
    %c0_34 = arith.constant 0 : index
    %26 = vector.load %arg4[%c0_31, %c0_32, %c0_33, %c0_34] : memref<1x1x384x128xf32, #tpu.memory_space<vmem>>, vector<1x1x384x128xf32>
    %27 = vector.shape_cast %26 : vector<1x1x384x128xf32> to vector<384x128xf32>
    %28 = vector.shape_cast %25 : vector<384x128xf32> to vector<1x1x384x128xf32>
    tpu.vector_store %arg4[%c0_31, %c0_32, %c0_33, %c0_34], %28 {strides = array<i32>} : memref<1x1x384x128xf32, #tpu.memory_space<vmem>>, vector<1x1x384x128xf32>,
    return
  }
  func.func @transform_0(%arg0: i32, %arg1: i32) -> (i32, i32, i32, i32) {
    %c0_i32 = arith.constant 0 : i32
    %c0_i32_0 = arith.constant 0 : i32
    %c0_i32_1 = arith.constant 0 : i32
    return %arg0, %arg1, %c0_i32, %c0_i32_0 : i32, i32, i32, i32
  }
  func.func @transform_1(%arg0: i32, %arg1: i32) -> (i32, i32) {
    %c0_i32 = arith.constant 0 : i32
    %c0_i32_0 = arith.constant 0 : i32
    %c0_i32_1 = arith.constant 0 : i32
    return %c0_i32, %c0_i32_0 : i32, i32
  }
  func.func @transform_2(%arg0: i32, %arg1: i32) -> (i32, i32, i32, i32) {
    %c0_i32 = arith.constant 0 : i32
    %c0_i32_0 = arith.constant 0 : i32
    %c0_i32_1 = arith.constant 0 : i32
    return %arg0, %arg1, %c0_i32, %c0_i32_0 : i32, i32, i32, i32
  }
}

</mosaic_0001>

<llo_original>
// kernel: basic_conv2d.1
$region0: #{basic_conv2d.1}
  #allocation0 [shape = 'u32[]', space=smem, size = 0x4, offset = 0x4, fixed_abs, tag = 'smem constant byte address 0x4 - core index']
  #allocation1 [shape = 'u32[144,128]{1,0:T(1,128)}', space=vmem, size = 0x12000, scoped, tag = 'internal scratch']
  %s0 = inlined_call_operand.vmem [shape: bf16[2,1,440,8], index: 0, kind: input, shape index: {}]
  %s1 = inlined_call_operand.vmem [shape: bf16[72,128], index: 1, kind: input, shape index: {}]
  %s2 = inlined_call_operand.vmem [shape: f32[2,1,384,128], index: 2, kind: output, shape index: {}]
  %s3 = sld [smem:[#allocation0]]
  $region41: #{basic_conv2d.1} parent=0
    _
  %s5 = ssub.s32 1, %s3
  %s6 = scalar_select 0, %s5, %s3
  loop: start=0, step=1, limit=4
  $region2: #{basic_conv2d.1} parent=0 // loop_pre_header
    _
  $region3: #{basic_conv2d.1} parent=0 // loop_header
    %s8 = sphi 0, %s12
    %p9 = scmp.ge.s32.totalorder %s8, 4
    %s15 = sphi 0, %s27
    %s16 = sphi 0, %s23
    %s17 = sphi 0, %s15
    %s18 = sphi 0, %s16
    %s19 = sphi 0, %s17
    %s20 = sphi 0, %s18
    %s32 = sphi 0, %s34
    %s35 = sphi 0, %s32
    %s36 = sphi 0, %s35
    %s52 = sphi 0, %s36
    %s56 = sphi 0, %s56
    %s58 = sphi 0, %s56
    %s59 = sphi 0, %s58
    %s73 = sphi 0, %s59
    %s81 = sphi 0, %s83
    %s84 = sphi 0, %s81
    %s85 = sphi 0, %s84
    %s101 = sphi 0, %s85
  $region4: #{basic_conv2d.1} parent=0 // loop_header_branch
    %11 = sbr.rel (%p9) target = $region8
  $region5: #{basic_conv2d.1} parent=0 // loop_body
    %s13 = ssub.s32 %s8, 1
    %s14 = ssub.s32 %s8, 2
    %s21 = sadd.s32 1, %s16
    %p22 = scmp.ge.s32.totalorder %s21, 1
    %s23 = scalar_select %p22, 0, %s21
    %s24 = sadd.s32 1, %s15
    %s25 = scalar_select %p22, %s24, %s15
    %p26 = scmp.ge.s32.totalorder %s25, 2
    %s27 = scalar_select %p26, 0, %s25
    %s28 = ssub.s32 %s15, %s27
    %s29 = ssub.s32 %s16, %s23
    %s30 = sor.u32 %s28, %s29
    %p31 = scmp.eq.s32.totalorder %s30, 0
    %s33 = sadd.s32 %s32, 1
    %s34 = scalar_select %p31, %s32, %s33
    %p37 = pneg %p31
    %p38 = scmp.eq.s32.totalorder %s8, 1
    %p39 = por %p37, %p38
    %p40 = scmp.ne.s32.totalorder %s32, %s35
    %p41 = scmp.eq.s32.totalorder %s8, 0
    %p42 = por %p40, %p41
    %p43 = scmp.ne.s32.totalorder %s32, %s35
    %p44 = scmp.eq.s32.totalorder %s13, 1
    %p45 = por %p43, %p44
    %p46 = scmp.ne.s32.totalorder %s35, %s36
    %p47 = scmp.eq.s32.totalorder %s13, 0
    %p48 = por %p46, %p47
    %p49 = scmp.ne.s32.totalorder %s35, %s36
    %p50 = scmp.eq.s32.totalorder %s14, 1
    %p51 = por %p49, %p50
    %p53 = scmp.ne.s32.totalorder %s36, %s52
    %p54 = scmp.eq.s32.totalorder %s14, 0
    %p55 = por %p53, %p54
    %s57 = sadd.s32 %s56, 1
    %p60 = scmp.eq.s32.totalorder %s8, 1
    %p61 = scmp.ne.s32.totalorder %s56, %s58
    %p62 = scmp.eq.s32.totalorder %s8, 0
    %p63 = por %p61, %p62
    %p64 = scmp.ne.s32.totalorder %s56, %s58
    %p65 = scmp.eq.s32.totalorder %s13, 1
    %p66 = por %p64, %p65
    %p67 = scmp.ne.s32.totalorder %s58, %s59
    %p68 = scmp.eq.s32.totalorder %s13, 0
    %p69 = por %p67, %p68
    %p70 = scmp.ne.s32.totalorder %s58, %s59
    %p71 = scmp.eq.s32.totalorder %s14, 1
    %p72 = por %p70, %p71
    %p74 = scmp.ne.s32.totalorder %s59, %s73
    %p75 = scmp.eq.s32.totalorder %s14, 0
    %p76 = por %p74, %p75
    %s77 = ssub.s32 %s15, %s27
    %s78 = ssub.s32 %s16, %s23
    %s79 = sor.u32 %s77, %s78
    %p80 = scmp.eq.s32.totalorder %s79, 0
    %s82 = sadd.s32 %s81, 1
    %s83 = scalar_select %p80, %s81, %s82
    %p86 = pneg %p80
    %p87 = scmp.eq.s32.totalorder %s8, 1
    %p88 = por %p86, %p87
    %p89 = scmp.ne.s32.totalorder %s81, %s84
    %p90 = scmp.eq.s32.totalorder %s8, 0
    %p91 = por %p89, %p90
    %p92 = scmp.ne.s32.totalorder %s81, %s84
    %p93 = scmp.eq.s32.totalorder %s13, 1
    %p94 = por %p92, %p93
    %p95 = scmp.ne.s32.totalorder %s84, %s85
    %p96 = scmp.eq.s32.totalorder %s13, 0
    %p97 = por %p95, %p96
    %p98 = scmp.ne.s32.totalorder %s84, %s85
    %p99 = scmp.eq.s32.totalorder %s14, 1
    %p100 = por %p98, %p99
    %p102 = scmp.ne.s32.totalorder %s85, %s101
    %p103 = scmp.eq.s32.totalorder %s14, 0
    %p104 = por %p102, %p103
    %p105 = scmp.le.s32.totalorder 1, %s8
    %p106 = scmp.lt.s32.totalorder %s8, 3
    %p107 = pnand %p105, %p106
    %p108 = pneg %p107
    // Predicated region
    $region9: #{basic_conv2d.1} parent=5 // pred_check
      _
    $region10: #{basic_conv2d.1} parent=5 // pred_check_branch
      %110 = sbr.rel (%p107) target = $region12
    $region11: #{basic_conv2d.1} parent=5 // pred_region
      %s111 = ssub.s32 %s8, 1
      // Predicated region
      $region13: #{basic_conv2d.1} parent=11 // pred_check
        %p112 = pneg %p69
      $region14: #{basic_conv2d.1} parent=11 // pred_check_branch
        %114 = sbr.rel (%p112) target = $region16
      $region15: #{basic_conv2d.1} parent=11 // pred_region
        _
      $region16: #{basic_conv2d.1} parent=11 // pred_fallthru
        _
    $region12: #{basic_conv2d.1} parent=5 // pred_fallthru
      _
    %p115 = scmp.lt.s32.totalorder %s8, 2
    // Predicated region
    $region17: #{basic_conv2d.1} parent=5 // pred_check
      %p116 = pneg %p115
    $region18: #{basic_conv2d.1} parent=5 // pred_check_branch
      %118 = sbr.rel (%p116) target = $region20
    $region19: #{basic_conv2d.1} parent=5 // pred_region
      // Predicated region
      $region21: #{basic_conv2d.1} parent=19 // pred_check
        %p119 = pneg %p42
      $region22: #{basic_conv2d.1} parent=19 // pred_check_branch
        %121 = sbr.rel (%p119) target = $region24
      $region23: #{basic_conv2d.1} parent=19 // pred_region
        %p122 = scmp.lt.s32.totalorder %s15, 1
        %s123 = scalar_select %p122, %s15, 1
        %p124 = scmp.lt.s32.totalorder %s16, 0
        %s125 = scalar_select %p124, %s16, 0
        %s126 = smul.addr %s125, 55
        %s127 = smul.addr %s123, 55
        %s128 = sadd.s32 %s126, %s127
        %s129 = smul.addr %s128, 4
        %s130 = scalar_lea.vmem %s0, %s129
      $region24: #{basic_conv2d.1} parent=19 // pred_fallthru
        _
    $region20: #{basic_conv2d.1} parent=5 // pred_fallthru
      _
    %p131 = scmp.le.s32.totalorder 1, %s8
    %p132 = scmp.lt.s32.totalorder %s8, 3
    %p133 = pnand %p131, %p132
    %p134 = pneg %p133
    // Predicated region
    $region25: #{basic_conv2d.1} parent=5 // pred_check
      _
    $region26: #{basic_conv2d.1} parent=5 // pred_check_branch
      %136 = sbr.rel (%p133) target = $region28
    $region27: #{basic_conv2d.1} parent=5 // pred_region
      %s137 = ssub.s32 %s8, 1
      %p138 = scmp.lt.s32.totalorder %s17, 1
      %s139 = scalar_select %p138, %s17, 1
      %p140 = scmp.lt.s32.totalorder %s18, 0
      %s141 = scalar_select %p140, %s18, 0
      %s142 = smul.addr %s141, 55
      %s143 = smul.addr %s139, 55
      %s144 = sadd.s32 %s142, %s143
      %s145 = smul.addr %s144, 4
      %s146 = scalar_lea.vmem %s0, %s145
      %p147 = pneg %p48
      %p148 = pneg %p45
      %p149 = pneg %p69
      %p150 = pneg %p66
      %p151 = pneg %p97
      %p152 = pneg %p94
      %p153 = scmp.lt.s32.totalorder %s17, 1
      %s154 = scalar_select %p153, %s17, 1
      %p155 = scmp.lt.s32.totalorder %s18, 0
      %s156 = scalar_select %p155, %s18, 0
      %s157 = smul.addr %s156, 48
      %s158 = smul.addr %s154, 48
      %s159 = sadd.s32 %s157, %s158
      %s160 = smul.addr %s159, 8
      %s161 = scalar_lea.vmem %s2, %s160
      %p162 = scmp.lt.s32.totalorder %s17, 1
      %s163 = scalar_select %p162, %s17, 1
      %p164 = scmp.lt.s32.totalorder %s18, 0
      %s165 = scalar_select %p164, %s18, 0
      %s166 = smul.addr %s165, 55
      %s167 = smul.addr %s163, 55
      %s168 = sadd.s32 %s166, %s167
      %s169 = smul.addr %s168, 4
      %s170 = scalar_lea.vmem %s0, %s169
      %p171 = scmp.lt.s32.totalorder %s17, 1
      %s172 = scalar_select %p171, %s17, 1
      %p173 = scmp.lt.s32.totalorder %s18, 0
      %s174 = scalar_select %p173, %s18, 0
      %s175 = smul.addr %s174, 48
      %s176 = smul.addr %s172, 48
      %s177 = sadd.s32 %s175, %s176
      %s178 = smul.addr %s177, 8
      %s179 = scalar_lea.vmem %s2, %s178
      %v181 = vld [vmem:[%s170] sm:$0xf]
      %v182 = vld [vmem:[%s170 + $0x4] sm:$0xf]
      %v183 = vld [vmem:[%s170 + $0x8] sm:$0xf]
      %v184 = vld [vmem:[%s170 + $0xc] sm:$0xf]
      %v185 = vld [vmem:[%s170 + $0x10] sm:$0xf]
      %v186 = vld [vmem:[%s170 + $0x14] sm:$0xf]
      %v187 = vld [vmem:[%s170 + $0x18] sm:$0xf]
      %v188 = vld [vmem:[%s170 + $0x1c] sm:$0xf]
      %v189 = vld [vmem:[%s170 + $0x20] sm:$0xf]
      %v190 = vld [vmem:[%s170 + $0x24] sm:$0xf]
      %v191 = vld [vmem:[%s170 + $0x28] sm:$0xf]
      %v192 = vld [vmem:[%s170 + $0x2c] sm:$0xf]
      %v193 = vld [vmem:[%s170 + $0x30] sm:$0xf]
      %v194 = vld [vmem:[%s170 + $0x34] sm:$0xf]
      %v195 = vld [vmem:[%s170 + $0x38] sm:$0xf]
      %v196 = vld [vmem:[%s170 + $0x3c] sm:$0xf]
      %v197 = vld [vmem:[%s170 + $0x40] sm:$0xf]
      %v198 = vld [vmem:[%s170 + $0x44] sm:$0xf]
      %v199 = vld [vmem:[%s170 + $0x48] sm:$0xf]
      %v200 = vld [vmem:[%s170 + $0x4c] sm:$0xf]
      %v201 = vld [vmem:[%s170 + $0x50] sm:$0xf]
      %v202 = vld [vmem:[%s170 + $0x54] sm:$0xf]
      %v203 = vld [vmem:[%s170 + $0x58] sm:$0xf]
      %v204 = vld [vmem:[%s170 + $0x5c] sm:$0xf]
      %v205 = vld [vmem:[%s170 + $0x60] sm:$0xf]
      %v206 = vld [vmem:[%s170 + $0x64] sm:$0xf]
      %v207 = vld [vmem:[%s170 + $0x68] sm:$0xf]
      %v208 = vld [vmem:[%s170 + $0x6c] sm:$0xf]
      %v209 = vld [vmem:[%s170 + $0x70] sm:$0xf]
      %v210 = vld [vmem:[%s170 + $0x74] sm:$0xf]
      %v211 = vld [vmem:[%s170 + $0x78] sm:$0xf]
      %v212 = vld [vmem:[%s170 + $0x7c] sm:$0xf]
      %v213 = vld [vmem:[%s170 + $0x80] sm:$0xf]
      %v214 = vld [vmem:[%s170 + $0x84] sm:$0xf]
      %v215 = vld [vmem:[%s170 + $0x88] sm:$0xf]
      %v216 = vld [vmem:[%s170 + $0x8c] sm:$0xf]
      %v217 = vld [vmem:[%s170 + $0x90] sm:$0xf]
      %v218 = vld [vmem:[%s170 + $0x94] sm:$0xf]
      %v219 = vld [vmem:[%s170 + $0x98] sm:$0xf]
      %v220 = vld [vmem:[%s170 + $0x9c] sm:$0xf]
      %v221 = vld [vmem:[%s170 + $0xa0] sm:$0xf]
      %v222 = vld [vmem:[%s170 + $0xa4] sm:$0xf]
      %v223 = vld [vmem:[%s170 + $0xa8] sm:$0xf]
      %v224 = vld [vmem:[%s170 + $0xac] sm:$0xf]
      %v225 = vld [vmem:[%s170 + $0xb0] sm:$0xf]
      %v226 = vld [vmem:[%s170 + $0xb4] sm:$0xf]
      %v227 = vld [vmem:[%s170 + $0xb8] sm:$0xf]
      %v228 = vld [vmem:[%s170 + $0xbc] sm:$0xf]
      %v229 = vld [vmem:[%s170 + $0xc0] sm:$0x1]
      %v230 = vld [vmem:[%s170] sm:$0xe]
      %v231 = vld [vmem:[%s170 + $0xc0] sm:$0xf]
      %v232 = vld [vmem:[%s170 + $0xc4] sm:$0xf]
      %v233 = vld [vmem:[%s170 + $0xc8] sm:$0xf]
      %v234 = vld [vmem:[%s170 + $0xcc] sm:$0x1]
      %v235 = vld [vmem:[%s170 + $0xc] sm:$0xe]
      %v236 = vld [vmem:[%s170 + $0xcc] sm:$0xf]
      %v237 = vld [vmem:[%s170 + $0xd0] sm:$0xf]
      %v238 = vld [vmem:[%s170 + $0xd4] sm:$0xf]
      %v239 = vld [vmem:[%s170 + $0xd8] sm:$0x1]
      %v240 = vld [vmem:[%s170 + $0x18] sm:$0xe]
      %v289 = vunpack.c.l.b16 %v181
      %v290 = vunpack.c.l.b16 %v182
      %v291 = vunpack.c.l.b16 %v183
      %v292 = vunpack.c.l.b16 %v184
      %v293 = vunpack.c.l.b16 %v185
      %v294 = vunpack.c.l.b16 %v186
      %v295 = vunpack.c.l.b16 %v187
      %v296 = vunpack.c.l.b16 %v188
      %v297 = vunpack.c.l.b16 %v189
      %v298 = vunpack.c.l.b16 %v190
      %v299 = vunpack.c.l.b16 %v191
      %v300 = vunpack.c.l.b16 %v192
      %v301 = vunpack.c.l.b16 %v193
      %v302 = vunpack.c.l.b16 %v194
      %v303 = vunpack.c.l.b16 %v195
      %v304 = vunpack.c.l.b16 %v196
      %v305 = vunpack.c.l.b16 %v197
      %v306 = vunpack.c.l.b16 %v198
      %v307 = vunpack.c.l.b16 %v199
      %v308 = vunpack.c.l.b16 %v200
      %v309 = vunpack.c.l.b16 %v201
      %v310 = vunpack.c.l.b16 %v202
      %v311 = vunpack.c.l.b16 %v203
      %v312 = vunpack.c.l.b16 %v204
      %v313 = vunpack.c.l.b16 %v205
      %v314 = vunpack.c.l.b16 %v206
      %v315 = vunpack.c.l.b16 %v207
      %v316 = vunpack.c.l.b16 %v208
      %v317 = vunpack.c.l.b16 %v209
      %v318 = vunpack.c.l.b16 %v210
      %v319 = vunpack.c.l.b16 %v211
      %v320 = vunpack.c.l.b16 %v212
      %v321 = vunpack.c.l.b16 %v213
      %v322 = vunpack.c.l.b16 %v214
      %v323 = vunpack.c.l.b16 %v215
      %v324 = vunpack.c.l.b16 %v216
      %v325 = vunpack.c.l.b16 %v217
      %v326 = vunpack.c.l.b16 %v218
      %v327 = vunpack.c.l.b16 %v219
      %v328 = vunpack.c.l.b16 %v220
      %v329 = vunpack.c.l.b16 %v221
      %v330 = vunpack.c.l.b16 %v222
      %v331 = vunpack.c.l.b16 %v223
      %v332 = vunpack.c.l.b16 %v224
      %v333 = vunpack.c.l.b16 %v225
      %v334 = vunpack.c.l.b16 %v226
      %v335 = vunpack.c.l.b16 %v227
      %v336 = vunpack.c.l.b16 %v228
      %v337 = vpack.c.b16 %v290, %v289
      %v338 = vpack.c.b16 %v292, %v291
      %v339 = vpack.c.b16 %v294, %v293
      %v340 = vpack.c.b16 %v296, %v295
      %v341 = vpack.c.b16 %v298, %v297
      %v342 = vpack.c.b16 %v300, %v299
      %v343 = vpack.c.b16 %v302, %v301
      %v344 = vpack.c.b16 %v304, %v303
      %v345 = vpack.c.b16 %v306, %v305
      %v346 = vpack.c.b16 %v308, %v307
      %v347 = vpack.c.b16 %v310, %v309
      %v348 = vpack.c.b16 %v312, %v311
      %v349 = vpack.c.b16 %v314, %v313
      %v350 = vpack.c.b16 %v316, %v315
      %v351 = vpack.c.b16 %v318, %v317
      %v352 = vpack.c.b16 %v320, %v319
      %v353 = vpack.c.b16 %v322, %v321
      %v354 = vpack.c.b16 %v324, %v323
      %v355 = vpack.c.b16 %v326, %v325
      %v356 = vpack.c.b16 %v328, %v327
      %v357 = vpack.c.b16 %v330, %v329
      %v358 = vpack.c.b16 %v332, %v331
      %v359 = vpack.c.b16 %v334, %v333
      %v360 = vpack.c.b16 %v336, %v335
      %v362 = vunpack.c.l.b16 %v229
      %v363 = vpack.c.b16 %v362, %v362
      %vm364 = vsmask.f32 7424
      %v366 = vshrl.u32 %v337, 16
      %v368 = vshll.u32 %v337, 16
      %v370 = vrot.slane %v368, 1
      %v371 = vor.u32 %v366, %v370
      %v373 = vshll.u32 %v338, 16
      %v375 = vrot.slane %v373, 1
      %v376 = vsel %vm364, %v371, %v375
      %v377 = vshrl.u32 %v338, 16
      %v379 = vor.u32 %v377, %v375
      %v381 = vshll.u32 %v339, 16
      %v383 = vrot.slane %v381, 1
      %v384 = vsel %vm364, %v379, %v383
      %v385 = vshrl.u32 %v339, 16
      %v387 = vor.u32 %v385, %v383
      %v389 = vshll.u32 %v340, 16
      %v391 = vrot.slane %v389, 1
      %v392 = vsel %vm364, %v387, %v391
      %v393 = vshrl.u32 %v340, 16
      %v395 = vor.u32 %v393, %v391
      %v397 = vshll.u32 %v341, 16
      %v399 = vrot.slane %v397, 1
      %v400 = vsel %vm364, %v395, %v399
      %v401 = vshrl.u32 %v341, 16
      %v403 = vor.u32 %v401, %v399
      %v405 = vshll.u32 %v342, 16
      %v407 = vrot.slane %v405, 1
      %v408 = vsel %vm364, %v403, %v407
      %v409 = vshrl.u32 %v342, 16
      %v411 = vor.u32 %v409, %v407
      %v413 = vshll.u32 %v343, 16
      %v415 = vrot.slane %v413, 1
      %v416 = vsel %vm364, %v411, %v415
      %v417 = vshrl.u32 %v343, 16
      %v419 = vor.u32 %v417, %v415
      %v421 = vshll.u32 %v344, 16
      %v423 = vrot.slane %v421, 1
      %v424 = vsel %vm364, %v419, %v423
      %v425 = vshrl.u32 %v344, 16
      %v427 = vor.u32 %v425, %v423
      %v429 = vshll.u32 %v345, 16
      %v431 = vrot.slane %v429, 1
      %v432 = vsel %vm364, %v427, %v431
      %v433 = vshrl.u32 %v345, 16
      %v435 = vor.u32 %v433, %v431
      %v437 = vshll.u32 %v346, 16
      %v439 = vrot.slane %v437, 1
      %v440 = vsel %vm364, %v435, %v439
      %v441 = vshrl.u32 %v346, 16
      %v443 = vor.u32 %v441, %v439
      %v445 = vshll.u32 %v347, 16
      %v447 = vrot.slane %v445, 1
      %v448 = vsel %vm364, %v443, %v447
      %v449 = vshrl.u32 %v347, 16
      %v451 = vor.u32 %v449, %v447
      %v453 = vshll.u32 %v348, 16
      %v455 = vrot.slane %v453, 1
      %v456 = vsel %vm364, %v451, %v455
      %v457 = vshrl.u32 %v348, 16
      %v459 = vor.u32 %v457, %v455
      %v461 = vshll.u32 %v349, 16
      %v463 = vrot.slane %v461, 1
      %v464 = vsel %vm364, %v459, %v463
      %v465 = vshrl.u32 %v349, 16
      %v467 = vor.u32 %v465, %v463
      %v469 = vshll.u32 %v350, 16
      %v471 = vrot.slane %v469, 1
      %v472 = vsel %vm364, %v467, %v471
      %v473 = vshrl.u32 %v350, 16
      %v475 = vor.u32 %v473, %v471
      %v477 = vshll.u32 %v351, 16
      %v479 = vrot.slane %v477, 1
      %v480 = vsel %vm364, %v475, %v479
      %v481 = vshrl.u32 %v351, 16
      %v483 = vor.u32 %v481, %v479
      %v485 = vshll.u32 %v352, 16
      %v487 = vrot.slane %v485, 1
      %v488 = vsel %vm364, %v483, %v487
      %v489 = vshrl.u32 %v352, 16
      %v491 = vor.u32 %v489, %v487
      %v493 = vshll.u32 %v353, 16
      %v495 = vrot.slane %v493, 1
      %v496 = vsel %vm364, %v491, %v495
      %v497 = vshrl.u32 %v353, 16
      %v499 = vor.u32 %v497, %v495
      %v501 = vshll.u32 %v354, 16
      %v503 = vrot.slane %v501, 1
      %v504 = vsel %vm364, %v499, %v503
      %v505 = vshrl.u32 %v354, 16
      %v507 = vor.u32 %v505, %v503
      %v509 = vshll.u32 %v355, 16
      %v511 = vrot.slane %v509, 1
      %v512 = vsel %vm364, %v507, %v511
      %v513 = vshrl.u32 %v355, 16
      %v515 = vor.u32 %v513, %v511
      %v517 = vshll.u32 %v356, 16
      %v519 = vrot.slane %v517, 1
      %v520 = vsel %vm364, %v515, %v519
      %v521 = vshrl.u32 %v356, 16
      %v523 = vor.u32 %v521, %v519
      %v525 = vshll.u32 %v357, 16
      %v527 = vrot.slane %v525, 1
      %v528 = vsel %vm364, %v523, %v527
      %v529 = vshrl.u32 %v357, 16
      %v531 = vor.u32 %v529, %v527
      %v533 = vshll.u32 %v358, 16
      %v535 = vrot.slane %v533, 1
      %v536 = vsel %vm364, %v531, %v535
      %v537 = vshrl.u32 %v358, 16
      %v539 = vor.u32 %v537, %v535
      %v541 = vshll.u32 %v359, 16
      %v543 = vrot.slane %v541, 1
      %v544 = vsel %vm364, %v539, %v543
      %v545 = vshrl.u32 %v359, 16
      %v547 = vor.u32 %v545, %v543
      %v549 = vshll.u32 %v360, 16
      %v551 = vrot.slane %v549, 1
      %v552 = vsel %vm364, %v547, %v551
      %v553 = vshrl.u32 %v360, 16
      %v555 = vor.u32 %v553, %v551
      %v557 = vshll.u32 %v363, 16
      %v559 = vrot.slane %v557, 1
      %v560 = vsel %vm364, %v555, %v559
      %561 = vrot.lane.b32.xlu0 %v376, 8
      %v562 = vpop.permute.xlu0 %561
      %563 = vrot.lane.b32.xlu0 %v384, 8
      %v564 = vpop.permute.xlu0 %563
      %565 = vrot.lane.b32.xlu0 %v392, 8
      %v566 = vpop.permute.xlu0 %565
      %567 = vrot.lane.b32.xlu0 %v400, 8
      %v568 = vpop.permute.xlu0 %567
      %569 = vrot.lane.b32.xlu0 %v408, 8
      %v570 = vpop.permute.xlu0 %569
      %571 = vrot.lane.b32.xlu0 %v416, 8
      %v572 = vpop.permute.xlu0 %571
      %573 = vrot.lane.b32.xlu0 %v424, 8
      %v574 = vpop.permute.xlu0 %573
      %575 = vrot.lane.b32.xlu0 %v432, 8
      %v576 = vpop.permute.xlu0 %575
      %577 = vrot.lane.b32.xlu0 %v440, 8
      %v578 = vpop.permute.xlu0 %577
      %579 = vrot.lane.b32.xlu0 %v448, 8
      %v580 = vpop.permute.xlu0 %579
      %581 = vrot.lane.b32.xlu0 %v456, 8
      %v582 = vpop.permute.xlu0 %581
      %583 = vrot.lane.b32.xlu0 %v464, 8
      %v584 = vpop.permute.xlu0 %583
      %585 = vrot.lane.b32.xlu0 %v472, 8
      %v586 = vpop.permute.xlu0 %585
      %587 = vrot.lane.b32.xlu0 %v480, 8
      %v588 = vpop.permute.xlu0 %587
      %589 = vrot.lane.b32.xlu0 %v488, 8
      %v590 = vpop.permute.xlu0 %589
      %591 = vrot.lane.b32.xlu0 %v496, 8
      %v592 = vpop.permute.xlu0 %591
      %593 = vrot.lane.b32.xlu0 %v504, 8
      %v594 = vpop.permute.xlu0 %593
      %595 = vrot.lane.b32.xlu0 %v512, 8
      %v596 = vpop.permute.xlu0 %595
      %597 = vrot.lane.b32.xlu0 %v520, 8
      %v598 = vpop.permute.xlu0 %597
      %599 = vrot.lane.b32.xlu0 %v528, 8
      %v600 = vpop.permute.xlu0 %599
      %601 = vrot.lane.b32.xlu0 %v536, 8
      %v602 = vpop.permute.xlu0 %601
      %603 = vrot.lane.b32.xlu0 %v544, 8
      %v604 = vpop.permute.xlu0 %603
      %605 = vrot.lane.b32.xlu0 %v552, 8
      %v606 = vpop.permute.xlu0 %605
      %607 = vrot.lane.b32.xlu0 %v560, 8
      %v608 = vpop.permute.xlu0 %607
      %v610 = vunpack.c.l.b16 %v230
      %v611 = vpack.c.b16 %v290, %v610
      %vm612 = vcmask 1046528
      %v613 = vrot.slane %v611, 1
      %v614 = vrot.slane %v338, 1
      %v615 = vsel %vm612, %v613, %v614
      %v616 = vrot.slane %v339, 1
      %v617 = vsel %vm612, %v614, %v616
      %v618 = vrot.slane %v340, 1
      %v619 = vsel %vm612, %v616, %v618
      %v620 = vrot.slane %v341, 1
      %v621 = vsel %vm612, %v618, %v620
      %v622 = vrot.slane %v342, 1
      %v623 = vsel %vm612, %v620, %v622
      %v624 = vrot.slane %v343, 1
      %v625 = vsel %vm612, %v622, %v624
      %v626 = vrot.slane %v344, 1
      %v627 = vsel %vm612, %v624, %v626
      %v628 = vrot.slane %v345, 1
      %v629 = vsel %vm612, %v626, %v628
      %v630 = vrot.slane %v346, 1
      %v631 = vsel %vm612, %v628, %v630
      %v632 = vrot.slane %v347, 1
      %v633 = vsel %vm612, %v630, %v632
      %v634 = vrot.slane %v348, 1
      %v635 = vsel %vm612, %v632, %v634
      %v636 = vrot.slane %v349, 1
      %v637 = vsel %vm612, %v634, %v636
      %v638 = vrot.slane %v350, 1
      %v639 = vsel %vm612, %v636, %v638
      %v640 = vrot.slane %v351, 1
      %v641 = vsel %vm612, %v638, %v640
      %v642 = vrot.slane %v352, 1
      %v643 = vsel %vm612, %v640, %v642
      %v644 = vrot.slane %v353, 1
      %v645 = vsel %vm612, %v642, %v644
      %v646 = vrot.slane %v354, 1
      %v647 = vsel %vm612, %v644, %v646
      %v648 = vrot.slane %v355, 1
      %v649 = vsel %vm612, %v646, %v648
      %v650 = vrot.slane %v356, 1
      %v651 = vsel %vm612, %v648, %v650
      %v652 = vrot.slane %v357, 1
      %v653 = vsel %vm612, %v650, %v652
      %v654 = vrot.slane %v358, 1
      %v655 = vsel %vm612, %v652, %v654
      %v656 = vrot.slane %v359, 1
      %v657 = vsel %vm612, %v654, %v656
      %v658 = vrot.slane %v360, 1
      %v659 = vsel %vm612, %v656, %v658
      %v660 = vrot.slane %v363, 1
      %v661 = vsel %vm612, %v658, %v660
      %662 = vrot.lane.b32.xlu0 %v615, 16
      %v663 = vpop.permute.xlu0 %662
      %664 = vrot.lane.b32.xlu0 %v617, 16
      %v665 = vpop.permute.xlu0 %664
      %666 = vrot.lane.b32.xlu0 %v619, 16
      %v667 = vpop.permute.xlu0 %666
      %668 = vrot.lane.b32.xlu0 %v621, 16
      %v669 = vpop.permute.xlu0 %668
      %670 = vrot.lane.b32.xlu0 %v623, 16
      %v671 = vpop.permute.xlu0 %670
      %672 = vrot.lane.b32.xlu0 %v625, 16
      %v673 = vpop.permute.xlu0 %672
      %674 = vrot.lane.b32.xlu0 %v627, 16
      %v675 = vpop.permute.xlu0 %674
      %676 = vrot.lane.b32.xlu0 %v629, 16
      %v677 = vpop.permute.xlu0 %676
      %678 = vrot.lane.b32.xlu0 %v631, 16
      %v679 = vpop.permute.xlu0 %678
      %680 = vrot.lane.b32.xlu0 %v633, 16
      %v681 = vpop.permute.xlu0 %680
      %682 = vrot.lane.b32.xlu0 %v635, 16
      %v683 = vpop.permute.xlu0 %682
      %684 = vrot.lane.b32.xlu0 %v637, 16
      %v685 = vpop.permute.xlu0 %684
      %686 = vrot.lane.b32.xlu0 %v639, 16
      %v687 = vpop.permute.xlu0 %686
      %688 = vrot.lane.b32.xlu0 %v641, 16
      %v689 = vpop.permute.xlu0 %688
      %690 = vrot.lane.b32.xlu0 %v643, 16
      %v691 = vpop.permute.xlu0 %690
      %692 = vrot.lane.b32.xlu0 %v645, 16
      %v693 = vpop.permute.xlu0 %692
      %694 = vrot.lane.b32.xlu0 %v647, 16
      %v695 = vpop.permute.xlu0 %694
      %696 = vrot.lane.b32.xlu0 %v649, 16
      %v697 = vpop.permute.xlu0 %696
      %698 = vrot.lane.b32.xlu0 %v651, 16
      %v699 = vpop.permute.xlu0 %698
      %700 = vrot.lane.b32.xlu0 %v653, 16
      %v701 = vpop.permute.xlu0 %700
      %702 = vrot.lane.b32.xlu0 %v655, 16
      %v703 = vpop.permute.xlu0 %702
      %704 = vrot.lane.b32.xlu0 %v657, 16
      %v705 = vpop.permute.xlu0 %704
      %706 = vrot.lane.b32.xlu0 %v659, 16
      %v707 = vpop.permute.xlu0 %706
      %708 = vrot.lane.b32.xlu0 %v661, 16
      %v709 = vpop.permute.xlu0 %708
      %v713 = vunpack.c.l.b16 %v231
      %v714 = vunpack.c.l.b16 %v232
      %v715 = vunpack.c.l.b16 %v233
      %v716 = vpack.c.b16 %v293, %v292
      %v717 = vpack.c.b16 %v295, %v294
      %v718 = vpack.c.b16 %v297, %v296
      %v719 = vpack.c.b16 %v299, %v298
      %v720 = vpack.c.b16 %v301, %v300
      %v721 = vpack.c.b16 %v303, %v302
      %v722 = vpack.c.b16 %v305, %v304
      %v723 = vpack.c.b16 %v307, %v306
      %v724 = vpack.c.b16 %v309, %v308
      %v725 = vpack.c.b16 %v311, %v310
      %v726 = vpack.c.b16 %v313, %v312
      %v727 = vpack.c.b16 %v315, %v314
      %v728 = vpack.c.b16 %v317, %v316
      %v729 = vpack.c.b16 %v319, %v318
      %v730 = vpack.c.b16 %v321, %v320
      %v731 = vpack.c.b16 %v323, %v322
      %v732 = vpack.c.b16 %v325, %v324
      %v733 = vpack.c.b16 %v327, %v326
      %v734 = vpack.c.b16 %v329, %v328
      %v735 = vpack.c.b16 %v331, %v330
      %v736 = vpack.c.b16 %v333, %v332
      %v737 = vpack.c.b16 %v335, %v334
      %v738 = vpack.c.b16 %v713, %v336
      %v739 = vpack.c.b16 %v715, %v714
      %740 = vrot.lane.b32.xlu0 %v716, 24
      %v741 = vpop.permute.xlu0 %740
      %742 = vrot.lane.b32.xlu0 %v717, 24
      %v743 = vpop.permute.xlu0 %742
      %744 = vrot.lane.b32.xlu0 %v718, 24
      %v745 = vpop.permute.xlu0 %744
      %746 = vrot.lane.b32.xlu0 %v719, 24
      %v747 = vpop.permute.xlu0 %746
      %748 = vrot.lane.b32.xlu0 %v720, 24
      %v749 = vpop.permute.xlu0 %748
      %750 = vrot.lane.b32.xlu0 %v721, 24
      %v751 = vpop.permute.xlu0 %750
      %752 = vrot.lane.b32.xlu0 %v722, 24
      %v753 = vpop.permute.xlu0 %752
      %754 = vrot.lane.b32.xlu0 %v723, 24
      %v755 = vpop.permute.xlu0 %754
      %756 = vrot.lane.b32.xlu0 %v724, 24
      %v757 = vpop.permute.xlu0 %756
      %758 = vrot.lane.b32.xlu0 %v725, 24
      %v759 = vpop.permute.xlu0 %758
      %760 = vrot.lane.b32.xlu0 %v726, 24
      %v761 = vpop.permute.xlu0 %760
      %762 = vrot.lane.b32.xlu0 %v727, 24
      %v763 = vpop.permute.xlu0 %762
      %764 = vrot.lane.b32.xlu0 %v728, 24
      %v765 = vpop.permute.xlu0 %764
      %766 = vrot.lane.b32.xlu0 %v729, 24
      %v767 = vpop.permute.xlu0 %766
      %768 = vrot.lane.b32.xlu0 %v730, 24
      %v769 = vpop.permute.xlu0 %768
      %770 = vrot.lane.b32.xlu0 %v731, 24
      %v771 = vpop.permute.xlu0 %770
      %772 = vrot.lane.b32.xlu0 %v732, 24
      %v773 = vpop.permute.xlu0 %772
      %774 = vrot.lane.b32.xlu0 %v733, 24
      %v775 = vpop.permute.xlu0 %774
      %776 = vrot.lane.b32.xlu0 %v734, 24
      %v777 = vpop.permute.xlu0 %776
      %778 = vrot.lane.b32.xlu0 %v735, 24
      %v779 = vpop.permute.xlu0 %778
      %780 = vrot.lane.b32.xlu0 %v736, 24
      %v781 = vpop.permute.xlu0 %780
      %782 = vrot.lane.b32.xlu0 %v737, 24
      %v783 = vpop.permute.xlu0 %782
      %784 = vrot.lane.b32.xlu0 %v738, 24
      %v785 = vpop.permute.xlu0 %784
      %786 = vrot.lane.b32.xlu0 %v739, 24
      %v787 = vpop.permute.xlu0 %786
      %v789 = vunpack.c.l.b16 %v234
      %v790 = vpack.c.b16 %v789, %v789
      %v792 = vshrl.u32 %v716, 16
      %v794 = vshll.u32 %v716, 16
      %v796 = vrot.slane %v794, 1
      %v797 = vor.u32 %v792, %v796
      %v799 = vshll.u32 %v717, 16
      %v801 = vrot.slane %v799, 1
      %v802 = vsel %vm364, %v797, %v801
      %v803 = vshrl.u32 %v717, 16
      %v805 = vor.u32 %v803, %v801
      %v807 = vshll.u32 %v718, 16
      %v809 = vrot.slane %v807, 1
      %v810 = vsel %vm364, %v805, %v809
      %v811 = vshrl.u32 %v718, 16
      %v813 = vor.u32 %v811, %v809
      %v815 = vshll.u32 %v719, 16
      %v817 = vrot.slane %v815, 1
      %v818 = vsel %vm364, %v813, %v817
      %v819 = vshrl.u32 %v719, 16
      %v821 = vor.u32 %v819, %v817
      %v823 = vshll.u32 %v720, 16
      %v825 = vrot.slane %v823, 1
      %v826 = vsel %vm364, %v821, %v825
      %v827 = vshrl.u32 %v720, 16
      %v829 = vor.u32 %v827, %v825
      %v831 = vshll.u32 %v721, 16
      %v833 = vrot.slane %v831, 1
      %v834 = vsel %vm364, %v829, %v833
      %v835 = vshrl.u32 %v721, 16
      %v837 = vor.u32 %v835, %v833
      %v839 = vshll.u32 %v722, 16
      %v841 = vrot.slane %v839, 1
      %v842 = vsel %vm364, %v837, %v841
      %v843 = vshrl.u32 %v722, 16
      %v845 = vor.u32 %v843, %v841
      %v847 = vshll.u32 %v723, 16
      %v849 = vrot.slane %v847, 1
      %v850 = vsel %vm364, %v845, %v849
      %v851 = vshrl.u32 %v723, 16
      %v853 = vor.u32 %v851, %v849
      %v855 = vshll.u32 %v724, 16
      %v857 = vrot.slane %v855, 1
      %v858 = vsel %vm364, %v853, %v857
      %v859 = vshrl.u32 %v724, 16
      %v861 = vor.u32 %v859, %v857
      %v863 = vshll.u32 %v725, 16
      %v865 = vrot.slane %v863, 1
      %v866 = vsel %vm364, %v861, %v865
      %v867 = vshrl.u32 %v725, 16
      %v869 = vor.u32 %v867, %v865
      %v871 = vshll.u32 %v726, 16
      %v873 = vrot.slane %v871, 1
      %v874 = vsel %vm364, %v869, %v873
      %v875 = vshrl.u32 %v726, 16
      %v877 = vor.u32 %v875, %v873
      %v879 = vshll.u32 %v727, 16
      %v881 = vrot.slane %v879, 1
      %v882 = vsel %vm364, %v877, %v881
      %v883 = vshrl.u32 %v727, 16
      %v885 = vor.u32 %v883, %v881
      %v887 = vshll.u32 %v728, 16
      %v889 = vrot.slane %v887, 1
      %v890 = vsel %vm364, %v885, %v889
      %v891 = vshrl.u32 %v728, 16
      %v893 = vor.u32 %v891, %v889
      %v895 = vshll.u32 %v729, 16
      %v897 = vrot.slane %v895, 1
      %v898 = vsel %vm364, %v893, %v897
      %v899 = vshrl.u32 %v729, 16
      %v901 = vor.u32 %v899, %v897
      %v903 = vshll.u32 %v730, 16
      %v905 = vrot.slane %v903, 1
      %v906 = vsel %vm364, %v901, %v905
      %v907 = vshrl.u32 %v730, 16
      %v909 = vor.u32 %v907, %v905
      %v911 = vshll.u32 %v731, 16
      %v913 = vrot.slane %v911, 1
      %v914 = vsel %vm364, %v909, %v913
      %v915 = vshrl.u32 %v731, 16
      %v917 = vor.u32 %v915, %v913
      %v919 = vshll.u32 %v732, 16
      %v921 = vrot.slane %v919, 1
      %v922 = vsel %vm364, %v917, %v921
      %v923 = vshrl.u32 %v732, 16
      %v925 = vor.u32 %v923, %v921
      %v927 = vshll.u32 %v733, 16
      %v929 = vrot.slane %v927, 1
      %v930 = vsel %vm364, %v925, %v929
      %v931 = vshrl.u32 %v733, 16
      %v933 = vor.u32 %v931, %v929
      %v935 = vshll.u32 %v734, 16
      %v937 = vrot.slane %v935, 1
      %v938 = vsel %vm364, %v933, %v937
      %v939 = vshrl.u32 %v734, 16
      %v941 = vor.u32 %v939, %v937
      %v943 = vshll.u32 %v735, 16
      %v945 = vrot.slane %v943, 1
      %v946 = vsel %vm364, %v941, %v945
      %v947 = vshrl.u32 %v735, 16
      %v949 = vor.u32 %v947, %v945
      %v951 = vshll.u32 %v736, 16
      %v953 = vrot.slane %v951, 1
      %v954 = vsel %vm364, %v949, %v953
      %v955 = vshrl.u32 %v736, 16
      %v957 = vor.u32 %v955, %v953
      %v959 = vshll.u32 %v737, 16
      %v961 = vrot.slane %v959, 1
      %v962 = vsel %vm364, %v957, %v961
      %v963 = vshrl.u32 %v737, 16
      %v965 = vor.u32 %v963, %v961
      %v967 = vshll.u32 %v738, 16
      %v969 = vrot.slane %v967, 1
      %v970 = vsel %vm364, %v965, %v969
      %v971 = vshrl.u32 %v738, 16
      %v973 = vor.u32 %v971, %v969
      %v975 = vshll.u32 %v739, 16
      %v977 = vrot.slane %v975, 1
      %v978 = vsel %vm364, %v973, %v977
      %v979 = vshrl.u32 %v739, 16
      %v981 = vor.u32 %v979, %v977
      %v983 = vshll.u32 %v790, 16
      %v985 = vrot.slane %v983, 1
      %v986 = vsel %vm364, %v981, %v985
      %987 = vrot.lane.b32.xlu0 %v802, 32
      %v988 = vpop.permute.xlu0 %987
      %989 = vrot.lane.b32.xlu0 %v810, 32
      %v990 = vpop.permute.xlu0 %989
      %991 = vrot.lane.b32.xlu0 %v818, 32
      %v992 = vpop.permute.xlu0 %991
      %993 = vrot.lane.b32.xlu0 %v826, 32
      %v994 = vpop.permute.xlu0 %993
      %995 = vrot.lane.b32.xlu0 %v834, 32
      %v996 = vpop.permute.xlu0 %995
      %997 = vrot.lane.b32.xlu0 %v842, 32
      %v998 = vpop.permute.xlu0 %997
      %999 = vrot.lane.b32.xlu0 %v850, 32
      %v1000 = vpop.permute.xlu0 %999
      %1001 = vrot.lane.b32.xlu0 %v858, 32
      %v1002 = vpop.permute.xlu0 %1001
      %1003 = vrot.lane.b32.xlu0 %v866, 32
      %v1004 = vpop.permute.xlu0 %1003
      %1005 = vrot.lane.b32.xlu0 %v874, 32
      %v1006 = vpop.permute.xlu0 %1005
      %1007 = vrot.lane.b32.xlu0 %v882, 32
      %v1008 = vpop.permute.xlu0 %1007
      %1009 = vrot.lane.b32.xlu0 %v890, 32
      %v1010 = vpop.permute.xlu0 %1009
      %1011 = vrot.lane.b32.xlu0 %v898, 32
      %v1012 = vpop.permute.xlu0 %1011
      %1013 = vrot.lane.b32.xlu0 %v906, 32
      %v1014 = vpop.permute.xlu0 %1013
      %1015 = vrot.lane.b32.xlu0 %v914, 32
      %v1016 = vpop.permute.xlu0 %1015
      %1017 = vrot.lane.b32.xlu0 %v922, 32
      %v1018 = vpop.permute.xlu0 %1017
      %1019 = vrot.lane.b32.xlu0 %v930, 32
      %v1020 = vpop.permute.xlu0 %1019
      %1021 = vrot.lane.b32.xlu0 %v938, 32
      %v1022 = vpop.permute.xlu0 %1021
      %1023 = vrot.lane.b32.xlu0 %v946, 32
      %v1024 = vpop.permute.xlu0 %1023
      %1025 = vrot.lane.b32.xlu0 %v954, 32
      %v1026 = vpop.permute.xlu0 %1025
      %1027 = vrot.lane.b32.xlu0 %v962, 32
      %v1028 = vpop.permute.xlu0 %1027
      %1029 = vrot.lane.b32.xlu0 %v970, 32
      %v1030 = vpop.permute.xlu0 %1029
      %1031 = vrot.lane.b32.xlu0 %v978, 32
      %v1032 = vpop.permute.xlu0 %1031
      %1033 = vrot.lane.b32.xlu0 %v986, 32
      %v1034 = vpop.permute.xlu0 %1033
      %v1036 = vunpack.c.l.b16 %v235
      %v1037 = vpack.c.b16 %v293, %v1036
      %v1038 = vrot.slane %v1037, 1
      %v1039 = vrot.slane %v717, 1
      %v1040 = vsel %vm612, %v1038, %v1039
      %v1041 = vrot.slane %v718, 1
      %v1042 = vsel %vm612, %v1039, %v1041
      %v1043 = vrot.slane %v719, 1
      %v1044 = vsel %vm612, %v1041, %v1043
      %v1045 = vrot.slane %v720, 1
      %v1046 = vsel %vm612, %v1043, %v1045
      %v1047 = vrot.slane %v721, 1
      %v1048 = vsel %vm612, %v1045, %v1047
      %v1049 = vrot.slane %v722, 1
      %v1050 = vsel %vm612, %v1047, %v1049
      %v1051 = vrot.slane %v723, 1
      %v1052 = vsel %vm612, %v1049, %v1051
      %v1053 = vrot.slane %v724, 1
      %v1054 = vsel %vm612, %v1051, %v1053
      %v1055 = vrot.slane %v725, 1
      %v1056 = vsel %vm612, %v1053, %v1055
      %v1057 = vrot.slane %v726, 1
      %v1058 = vsel %vm612, %v1055, %v1057
      %v1059 = vrot.slane %v727, 1
      %v1060 = vsel %vm612, %v1057, %v1059
      %v1061 = vrot.slane %v728, 1
      %v1062 = vsel %vm612, %v1059, %v1061
      %v1063 = vrot.slane %v729, 1
      %v1064 = vsel %vm612, %v1061, %v1063
      %v1065 = vrot.slane %v730, 1
      %v1066 = vsel %vm612, %v1063, %v1065
      %v1067 = vrot.slane %v731, 1
      %v1068 = vsel %vm612, %v1065, %v1067
      %v1069 = vrot.slane %v732, 1
      %v1070 = vsel %vm612, %v1067, %v1069
      %v1071 = vrot.slane %v733, 1
      %v1072 = vsel %vm612, %v1069, %v1071
      %v1073 = vrot.slane %v734, 1
      %v1074 = vsel %vm612, %v1071, %v1073
      %v1075 = vrot.slane %v735, 1
      %v1076 = vsel %vm612, %v1073, %v1075
      %v1077 = vrot.slane %v736, 1
      %v1078 = vsel %vm612, %v1075, %v1077
      %v1079 = vrot.slane %v737, 1
      %v1080 = vsel %vm612, %v1077, %v1079
      %v1081 = vrot.slane %v738, 1
      %v1082 = vsel %vm612, %v1079, %v1081
      %v1083 = vrot.slane %v739, 1
      %v1084 = vsel %vm612, %v1081, %v1083
      %v1085 = vrot.slane %v790, 1
      %v1086 = vsel %vm612, %v1083, %v1085
      %1087 = vrot.lane.b32.xlu0 %v1040, 40
      %v1088 = vpop.permute.xlu0 %1087
      %1089 = vrot.lane.b32.xlu0 %v1042, 40
      %v1090 = vpop.permute.xlu0 %1089
      %1091 = vrot.lane.b32.xlu0 %v1044, 40
      %v1092 = vpop.permute.xlu0 %1091
      %1093 = vrot.lane.b32.xlu0 %v1046, 40
      %v1094 = vpop.permute.xlu0 %1093
      %1095 = vrot.lane.b32.xlu0 %v1048, 40
      %v1096 = vpop.permute.xlu0 %1095
      %1097 = vrot.lane.b32.xlu0 %v1050, 40
      %v1098 = vpop.permute.xlu0 %1097
      %1099 = vrot.lane.b32.xlu0 %v1052, 40
      %v1100 = vpop.permute.xlu0 %1099
      %1101 = vrot.lane.b32.xlu0 %v1054, 40
      %v1102 = vpop.permute.xlu0 %1101
      %1103 = vrot.lane.b32.xlu0 %v1056, 40
      %v1104 = vpop.permute.xlu0 %1103
      %1105 = vrot.lane.b32.xlu0 %v1058, 40
      %v1106 = vpop.permute.xlu0 %1105
      %1107 = vrot.lane.b32.xlu0 %v1060, 40
      %v1108 = vpop.permute.xlu0 %1107
      %1109 = vrot.lane.b32.xlu0 %v1062, 40
      %v1110 = vpop.permute.xlu0 %1109
      %1111 = vrot.lane.b32.xlu0 %v1064, 40
      %v1112 = vpop.permute.xlu0 %1111
      %1113 = vrot.lane.b32.xlu0 %v1066, 40
      %v1114 = vpop.permute.xlu0 %1113
      %1115 = vrot.lane.b32.xlu0 %v1068, 40
      %v1116 = vpop.permute.xlu0 %1115
      %1117 = vrot.lane.b32.xlu0 %v1070, 40
      %v1118 = vpop.permute.xlu0 %1117
      %1119 = vrot.lane.b32.xlu0 %v1072, 40
      %v1120 = vpop.permute.xlu0 %1119
      %1121 = vrot.lane.b32.xlu0 %v1074, 40
      %v1122 = vpop.permute.xlu0 %1121
      %1123 = vrot.lane.b32.xlu0 %v1076, 40
      %v1124 = vpop.permute.xlu0 %1123
      %1125 = vrot.lane.b32.xlu0 %v1078, 40
      %v1126 = vpop.permute.xlu0 %1125
      %1127 = vrot.lane.b32.xlu0 %v1080, 40
      %v1128 = vpop.permute.xlu0 %1127
      %1129 = vrot.lane.b32.xlu0 %v1082, 40
      %v1130 = vpop.permute.xlu0 %1129
      %1131 = vrot.lane.b32.xlu0 %v1084, 40
      %v1132 = vpop.permute.xlu0 %1131
      %1133 = vrot.lane.b32.xlu0 %v1086, 40
      %v1134 = vpop.permute.xlu0 %1133
      %v1138 = vunpack.c.l.b16 %v236
      %v1139 = vunpack.c.l.b16 %v237
      %v1140 = vunpack.c.l.b16 %v238
      %v1141 = vpack.c.b16 %v714, %v713
      %v1142 = vpack.c.b16 %v1138, %v715
      %v1143 = vpack.c.b16 %v1140, %v1139
      %1144 = vrot.lane.b32.xlu0 %v340, 48
      %v1145 = vpop.permute.xlu0 %1144
      %1146 = vrot.lane.b32.xlu0 %v341, 48
      %v1147 = vpop.permute.xlu0 %1146
      %1148 = vrot.lane.b32.xlu0 %v342, 48
      %v1149 = vpop.permute.xlu0 %1148
      %1150 = vrot.lane.b32.xlu0 %v343, 48
      %v1151 = vpop.permute.xlu0 %1150
      %1152 = vrot.lane.b32.xlu0 %v344, 48
      %v1153 = vpop.permute.xlu0 %1152
      %1154 = vrot.lane.b32.xlu0 %v345, 48
      %v1155 = vpop.permute.xlu0 %1154
      %1156 = vrot.lane.b32.xlu0 %v346, 48
      %v1157 = vpop.permute.xlu0 %1156
      %1158 = vrot.lane.b32.xlu0 %v347, 48
      %v1159 = vpop.permute.xlu0 %1158
      %1160 = vrot.lane.b32.xlu0 %v348, 48
      %v1161 = vpop.permute.xlu0 %1160
      %1162 = vrot.lane.b32.xlu0 %v349, 48
      %v1163 = vpop.permute.xlu0 %1162
      %1164 = vrot.lane.b32.xlu0 %v350, 48
      %v1165 = vpop.permute.xlu0 %1164
      %1166 = vrot.lane.b32.xlu0 %v351, 48
      %v1167 = vpop.permute.xlu0 %1166
      %1168 = vrot.lane.b32.xlu0 %v352, 48
      %v1169 = vpop.permute.xlu0 %1168
      %1170 = vrot.lane.b32.xlu0 %v353, 48
      %v1171 = vpop.permute.xlu0 %1170
      %1172 = vrot.lane.b32.xlu0 %v354, 48
      %v1173 = vpop.permute.xlu0 %1172
      %1174 = vrot.lane.b32.xlu0 %v355, 48
      %v1175 = vpop.permute.xlu0 %1174
      %1176 = vrot.lane.b32.xlu0 %v356, 48
      %v1177 = vpop.permute.xlu0 %1176
      %1178 = vrot.lane.b32.xlu0 %v357, 48
      %v1179 = vpop.permute.xlu0 %1178
      %1180 = vrot.lane.b32.xlu0 %v358, 48
      %v1181 = vpop.permute.xlu0 %1180
      %1182 = vrot.lane.b32.xlu0 %v359, 48
      %v1183 = vpop.permute.xlu0 %1182
      %1184 = vrot.lane.b32.xlu0 %v360, 48
      %v1185 = vpop.permute.xlu0 %1184
      %1186 = vrot.lane.b32.xlu0 %v1141, 48
      %v1187 = vpop.permute.xlu0 %1186
      %1188 = vrot.lane.b32.xlu0 %v1142, 48
      %v1189 = vpop.permute.xlu0 %1188
      %1190 = vrot.lane.b32.xlu0 %v1143, 48
      %v1191 = vpop.permute.xlu0 %1190
      %v1193 = vunpack.c.l.b16 %v239
      %v1194 = vpack.c.b16 %v1193, %v1193
      %v1196 = vshll.u32 %v1141, 16
      %v1198 = vrot.slane %v1196, 1
      %v1199 = vsel %vm364, %v555, %v1198
      %v1200 = vshrl.u32 %v1141, 16
      %v1202 = vor.u32 %v1200, %v1198
      %v1204 = vshll.u32 %v1142, 16
      %v1206 = vrot.slane %v1204, 1
      %v1207 = vsel %vm364, %v1202, %v1206
      %v1208 = vshrl.u32 %v1142, 16
      %v1210 = vor.u32 %v1208, %v1206
      %v1212 = vshll.u32 %v1143, 16
      %v1214 = vrot.slane %v1212, 1
      %v1215 = vsel %vm364, %v1210, %v1214
      %v1216 = vshrl.u32 %v1143, 16
      %v1218 = vor.u32 %v1216, %v1214
      %v1220 = vshll.u32 %v1194, 16
      %v1222 = vrot.slane %v1220, 1
      %v1223 = vsel %vm364, %v1218, %v1222
      %1224 = vrot.lane.b32.xlu0 %v400, 56
      %v1225 = vpop.permute.xlu0 %1224
      %1226 = vrot.lane.b32.xlu0 %v408, 56
      %v1227 = vpop.permute.xlu0 %1226
      %1228 = vrot.lane.b32.xlu0 %v416, 56
      %v1229 = vpop.permute.xlu0 %1228
      %1230 = vrot.lane.b32.xlu0 %v424, 56
      %v1231 = vpop.permute.xlu0 %1230
      %1232 = vrot.lane.b32.xlu0 %v432, 56
      %v1233 = vpop.permute.xlu0 %1232
      %1234 = vrot.lane.b32.xlu0 %v440, 56
      %v1235 = vpop.permute.xlu0 %1234
      %1236 = vrot.lane.b32.xlu0 %v448, 56
      %v1237 = vpop.permute.xlu0 %1236
      %1238 = vrot.lane.b32.xlu0 %v456, 56
      %v1239 = vpop.permute.xlu0 %1238
      %1240 = vrot.lane.b32.xlu0 %v464, 56
      %v1241 = vpop.permute.xlu0 %1240
      %1242 = vrot.lane.b32.xlu0 %v472, 56
      %v1243 = vpop.permute.xlu0 %1242
      %1244 = vrot.lane.b32.xlu0 %v480, 56
      %v1245 = vpop.permute.xlu0 %1244
      %1246 = vrot.lane.b32.xlu0 %v488, 56
      %v1247 = vpop.permute.xlu0 %1246
      %1248 = vrot.lane.b32.xlu0 %v496, 56
      %v1249 = vpop.permute.xlu0 %1248
      %1250 = vrot.lane.b32.xlu0 %v504, 56
      %v1251 = vpop.permute.xlu0 %1250
      %1252 = vrot.lane.b32.xlu0 %v512, 56
      %v1253 = vpop.permute.xlu0 %1252
      %1254 = vrot.lane.b32.xlu0 %v520, 56
      %v1255 = vpop.permute.xlu0 %1254
      %1256 = vrot.lane.b32.xlu0 %v528, 56
      %v1257 = vpop.permute.xlu0 %1256
      %1258 = vrot.lane.b32.xlu0 %v536, 56
      %v1259 = vpop.permute.xlu0 %1258
      %1260 = vrot.lane.b32.xlu0 %v544, 56
      %v1261 = vpop.permute.xlu0 %1260
      %1262 = vrot.lane.b32.xlu0 %v552, 56
      %v1263 = vpop.permute.xlu0 %1262
      %1264 = vrot.lane.b32.xlu0 %v1199, 56
      %v1265 = vpop.permute.xlu0 %1264
      %1266 = vrot.lane.b32.xlu0 %v1207, 56
      %v1267 = vpop.permute.xlu0 %1266
      %1268 = vrot.lane.b32.xlu0 %v1215, 56
      %v1269 = vpop.permute.xlu0 %1268
      %1270 = vrot.lane.b32.xlu0 %v1223, 56
      %v1271 = vpop.permute.xlu0 %1270
      %v1273 = vunpack.c.l.b16 %v240
      %v1274 = vpack.c.b16 %v296, %v1273
      %v1275 = vrot.slane %v1274, 1
      %v1276 = vsel %vm612, %v1275, %v620
      %v1277 = vrot.slane %v1141, 1
      %v1278 = vsel %vm612, %v658, %v1277
      %v1279 = vrot.slane %v1142, 1
      %v1280 = vsel %vm612, %v1277, %v1279
      %v1281 = vrot.slane %v1143, 1
      %v1282 = vsel %vm612, %v1279, %v1281
      %v1283 = vrot.slane %v1194, 1
      %v1284 = vsel %vm612, %v1281, %v1283
      %1285 = vrot.lane.b32.xlu0 %v1276, 64
      %v1286 = vpop.permute.xlu0 %1285
      %1287 = vrot.lane.b32.xlu0 %v623, 64
      %v1288 = vpop.permute.xlu0 %1287
      %1289 = vrot.lane.b32.xlu0 %v625, 64
      %v1290 = vpop.permute.xlu0 %1289
      %1291 = vrot.lane.b32.xlu0 %v627, 64
      %v1292 = vpop.permute.xlu0 %1291
      %1293 = vrot.lane.b32.xlu0 %v629, 64
      %v1294 = vpop.permute.xlu0 %1293
      %1295 = vrot.lane.b32.xlu0 %v631, 64
      %v1296 = vpop.permute.xlu0 %1295
      %1297 = vrot.lane.b32.xlu0 %v633, 64
      %v1298 = vpop.permute.xlu0 %1297
      %1299 = vrot.lane.b32.xlu0 %v635, 64
      %v1300 = vpop.permute.xlu0 %1299
      %1301 = vrot.lane.b32.xlu0 %v637, 64
      %v1302 = vpop.permute.xlu0 %1301
      %1303 = vrot.lane.b32.xlu0 %v639, 64
      %v1304 = vpop.permute.xlu0 %1303
      %1305 = vrot.lane.b32.xlu0 %v641, 64
      %v1306 = vpop.permute.xlu0 %1305
      %1307 = vrot.lane.b32.xlu0 %v643, 64
      %v1308 = vpop.permute.xlu0 %1307
      %1309 = vrot.lane.b32.xlu0 %v645, 64
      %v1310 = vpop.permute.xlu0 %1309
      %1311 = vrot.lane.b32.xlu0 %v647, 64
      %v1312 = vpop.permute.xlu0 %1311
      %1313 = vrot.lane.b32.xlu0 %v649, 64
      %v1314 = vpop.permute.xlu0 %1313
      %1315 = vrot.lane.b32.xlu0 %v651, 64
      %v1316 = vpop.permute.xlu0 %1315
      %1317 = vrot.lane.b32.xlu0 %v653, 64
      %v1318 = vpop.permute.xlu0 %1317
      %1319 = vrot.lane.b32.xlu0 %v655, 64
      %v1320 = vpop.permute.xlu0 %1319
      %1321 = vrot.lane.b32.xlu0 %v657, 64
      %v1322 = vpop.permute.xlu0 %1321
      %1323 = vrot.lane.b32.xlu0 %v659, 64
      %v1324 = vpop.permute.xlu0 %1323
      %1325 = vrot.lane.b32.xlu0 %v1278, 64
      %v1326 = vpop.permute.xlu0 %1325
      %1327 = vrot.lane.b32.xlu0 %v1280, 64
      %v1328 = vpop.permute.xlu0 %1327
      %1329 = vrot.lane.b32.xlu0 %v1282, 64
      %v1330 = vpop.permute.xlu0 %1329
      %1331 = vrot.lane.b32.xlu0 %v1284, 64
      %v1332 = vpop.permute.xlu0 %1331
      %vm1333 = vcmask 64512
      %v1335 = vsel %vm1333, %v337, %v562
      %v1337 = vsel %vm1333, %v338, %v564
      %v1339 = vsel %vm1333, %v339, %v566
      %v1341 = vsel %vm1333, %v340, %v568
      %v1343 = vsel %vm1333, %v341, %v570
      %v1345 = vsel %vm1333, %v342, %v572
      %v1347 = vsel %vm1333, %v343, %v574
      %v1349 = vsel %vm1333, %v344, %v576
      %v1351 = vsel %vm1333, %v345, %v578
      %v1353 = vsel %vm1333, %v346, %v580
      %v1355 = vsel %vm1333, %v347, %v582
      %v1357 = vsel %vm1333, %v348, %v584
      %v1359 = vsel %vm1333, %v349, %v586
      %v1361 = vsel %vm1333, %v350, %v588
      %v1363 = vsel %vm1333, %v351, %v590
      %v1365 = vsel %vm1333, %v352, %v592
      %v1367 = vsel %vm1333, %v353, %v594
      %v1369 = vsel %vm1333, %v354, %v596
      %v1371 = vsel %vm1333, %v355, %v598
      %v1373 = vsel %vm1333, %v356, %v600
      %v1375 = vsel %vm1333, %v357, %v602
      %v1377 = vsel %vm1333, %v358, %v604
      %v1379 = vsel %vm1333, %v359, %v606
      %v1381 = vsel %vm1333, %v360, %v608
      %vm1382 = vcmask 130048
      %v1384 = vsel %vm1382, %v1335, %v663
      %v1386 = vsel %vm1382, %v1337, %v665
      %v1388 = vsel %vm1382, %v1339, %v667
      %v1390 = vsel %vm1382, %v1341, %v669
      %v1392 = vsel %vm1382, %v1343, %v671
      %v1394 = vsel %vm1382, %v1345, %v673
      %v1396 = vsel %vm1382, %v1347, %v675
      %v1398 = vsel %vm1382, %v1349, %v677
      %v1400 = vsel %vm1382, %v1351, %v679
      %v1402 = vsel %vm1382, %v1353, %v681
      %v1404 = vsel %vm1382, %v1355, %v683
      %v1406 = vsel %vm1382, %v1357, %v685
      %v1408 = vsel %vm1382, %v1359, %v687
      %v1410 = vsel %vm1382, %v1361, %v689
      %v1412 = vsel %vm1382, %v1363, %v691
      %v1414 = vsel %vm1382, %v1365, %v693
      %v1416 = vsel %vm1382, %v1367, %v695
      %v1418 = vsel %vm1382, %v1369, %v697
      %v1420 = vsel %vm1382, %v1371, %v699
      %v1422 = vsel %vm1382, %v1373, %v701
      %v1424 = vsel %vm1382, %v1375, %v703
      %v1426 = vsel %vm1382, %v1377, %v705
      %v1428 = vsel %vm1382, %v1379, %v707
      %v1430 = vsel %vm1382, %v1381, %v709
      %vm1431 = vcmask 195584
      %v1433 = vsel %vm1431, %v1384, %v741
      %v1435 = vsel %vm1431, %v1386, %v743
      %v1437 = vsel %vm1431, %v1388, %v745
      %v1439 = vsel %vm1431, %v1390, %v747
      %v1441 = vsel %vm1431, %v1392, %v749
      %v1443 = vsel %vm1431, %v1394, %v751
      %v1445 = vsel %vm1431, %v1396, %v753
      %v1447 = vsel %vm1431, %v1398, %v755
      %v1449 = vsel %vm1431, %v1400, %v757
      %v1451 = vsel %vm1431, %v1402, %v759
      %v1453 = vsel %vm1431, %v1404, %v761
      %v1455 = vsel %vm1431, %v1406, %v763
      %v1457 = vsel %vm1431, %v1408, %v765
      %v1459 = vsel %vm1431, %v1410, %v767
      %v1461 = vsel %vm1431, %v1412, %v769
      %v1463 = vsel %vm1431, %v1414, %v771
      %v1465 = vsel %vm1431, %v1416, %v773
      %v1467 = vsel %vm1431, %v1418, %v775
      %v1469 = vsel %vm1431, %v1420, %v777
      %v1471 = vsel %vm1431, %v1422, %v779
      %v1473 = vsel %vm1431, %v1424, %v781
      %v1475 = vsel %vm1431, %v1426, %v783
      %v1477 = vsel %vm1431, %v1428, %v785
      %v1479 = vsel %vm1431, %v1430, %v787
      %vm1480 = vcmask 261120
      %v1482 = vsel %vm1480, %v1433, %v988
      %v1484 = vsel %vm1480, %v1435, %v990
      %v1486 = vsel %vm1480, %v1437, %v992
      %v1488 = vsel %vm1480, %v1439, %v994
      %v1490 = vsel %vm1480, %v1441, %v996
      %v1492 = vsel %vm1480, %v1443, %v998
      %v1494 = vsel %vm1480, %v1445, %v1000
      %v1496 = vsel %vm1480, %v1447, %v1002
      %v1498 = vsel %vm1480, %v1449, %v1004
      %v1500 = vsel %vm1480, %v1451, %v1006
      %v1502 = vsel %vm1480, %v1453, %v1008
      %v1504 = vsel %vm1480, %v1455, %v1010
      %v1506 = vsel %vm1480, %v1457, %v1012
      %v1508 = vsel %vm1480, %v1459, %v1014
      %v1510 = vsel %vm1480, %v1461, %v1016
      %v1512 = vsel %vm1480, %v1463, %v1018
      %v1514 = vsel %vm1480, %v1465, %v1020
      %v1516 = vsel %vm1480, %v1467, %v1022
      %v1518 = vsel %vm1480, %v1469, %v1024
      %v1520 = vsel %vm1480, %v1471, %v1026
      %v1522 = vsel %vm1480, %v1473, %v1028
      %v1524 = vsel %vm1480, %v1475, %v1030
      %v1526 = vsel %vm1480, %v1477, %v1032
      %v1528 = vsel %vm1480, %v1479, %v1034
      %vm1529 = vcmask 326656
      %v1531 = vsel %vm1529, %v1482, %v1088
      %v1533 = vsel %vm1529, %v1484, %v1090
      %v1535 = vsel %vm1529, %v1486, %v1092
      %v1537 = vsel %vm1529, %v1488, %v1094
      %v1539 = vsel %vm1529, %v1490, %v1096
      %v1541 = vsel %vm1529, %v1492, %v1098
      %v1543 = vsel %vm1529, %v1494, %v1100
      %v1545 = vsel %vm1529, %v1496, %v1102
      %v1547 = vsel %vm1529, %v1498, %v1104
      %v1549 = vsel %vm1529, %v1500, %v1106
      %v1551 = vsel %vm1529, %v1502, %v1108
      %v1553 = vsel %vm1529, %v1504, %v1110
      %v1555 = vsel %vm1529, %v1506, %v1112
      %v1557 = vsel %vm1529, %v1508, %v1114
      %v1559 = vsel %vm1529, %v1510, %v1116
      %v1561 = vsel %vm1529, %v1512, %v1118
      %v1563 = vsel %vm1529, %v1514, %v1120
      %v1565 = vsel %vm1529, %v1516, %v1122
      %v1567 = vsel %vm1529, %v1518, %v1124
      %v1569 = vsel %vm1529, %v1520, %v1126
      %v1571 = vsel %vm1529, %v1522, %v1128
      %v1573 = vsel %vm1529, %v1524, %v1130
      %v1575 = vsel %vm1529, %v1526, %v1132
      %v1577 = vsel %vm1529, %v1528, %v1134
      %vm1578 = vcmask 392192
      %v1580 = vsel %vm1578, %v1531, %v1145
      %v1582 = vsel %vm1578, %v1533, %v1147
      %v1584 = vsel %vm1578, %v1535, %v1149
      %v1586 = vsel %vm1578, %v1537, %v1151
      %v1588 = vsel %vm1578, %v1539, %v1153
      %v1590 = vsel %vm1578, %v1541, %v1155
      %v1592 = vsel %vm1578, %v1543, %v1157
      %v1594 = vsel %vm1578, %v1545, %v1159
      %v1596 = vsel %vm1578, %v1547, %v1161
      %v1598 = vsel %vm1578, %v1549, %v1163
      %v1600 = vsel %vm1578, %v1551, %v1165
      %v1602 = vsel %vm1578, %v1553, %v1167
      %v1604 = vsel %vm1578, %v1555, %v1169
      %v1606 = vsel %vm1578, %v1557, %v1171
      %v1608 = vsel %vm1578, %v1559, %v1173
      %v1610 = vsel %vm1578, %v1561, %v1175
      %v1612 = vsel %vm1578, %v1563, %v1177
      %v1614 = vsel %vm1578, %v1565, %v1179
      %v1616 = vsel %vm1578, %v1567, %v1181
      %v1618 = vsel %vm1578, %v1569, %v1183
      %v1620 = vsel %vm1578, %v1571, %v1185
      %v1622 = vsel %vm1578, %v1573, %v1187
      %v1624 = vsel %vm1578, %v1575, %v1189
      %v1626 = vsel %vm1578, %v1577, %v1191
      %vm1627 = vcmask 457728
      %v1629 = vsel %vm1627, %v1580, %v1225
      %v1631 = vsel %vm1627, %v1582, %v1227
      %v1633 = vsel %vm1627, %v1584, %v1229
      %v1635 = vsel %vm1627, %v1586, %v1231
      %v1637 = vsel %vm1627, %v1588, %v1233
      %v1639 = vsel %vm1627, %v1590, %v1235
      %v1641 = vsel %vm1627, %v1592, %v1237
      %v1643 = vsel %vm1627, %v1594, %v1239
      %v1645 = vsel %vm1627, %v1596, %v1241
      %v1647 = vsel %vm1627, %v1598, %v1243
      %v1649 = vsel %vm1627, %v1600, %v1245
      %v1651 = vsel %vm1627, %v1602, %v1247
      %v1653 = vsel %vm1627, %v1604, %v1249
      %v1655 = vsel %vm1627, %v1606, %v1251
      %v1657 = vsel %vm1627, %v1608, %v1253
      %v1659 = vsel %vm1627, %v1610, %v1255
      %v1661 = vsel %vm1627, %v1612, %v1257
      %v1663 = vsel %vm1627, %v1614, %v1259
      %v1665 = vsel %vm1627, %v1616, %v1261
      %v1667 = vsel %vm1627, %v1618, %v1263
      %v1669 = vsel %vm1627, %v1620, %v1265
      %v1671 = vsel %vm1627, %v1622, %v1267
      %v1673 = vsel %vm1627, %v1624, %v1269
      %v1675 = vsel %vm1627, %v1626, %v1271
      %vm1676 = vcmask 523264
      %v1678 = vsel %vm1676, %v1629, %v1286
      %v1680 = vsel %vm1676, %v1631, %v1288
      %v1682 = vsel %vm1676, %v1633, %v1290
      %v1684 = vsel %vm1676, %v1635, %v1292
      %v1686 = vsel %vm1676, %v1637, %v1294
      %v1688 = vsel %vm1676, %v1639, %v1296
      %v1690 = vsel %vm1676, %v1641, %v1298
      %v1692 = vsel %vm1676, %v1643, %v1300
      %v1694 = vsel %vm1676, %v1645, %v1302
      %v1696 = vsel %vm1676, %v1647, %v1304
      %v1698 = vsel %vm1676, %v1649, %v1306
      %v1700 = vsel %vm1676, %v1651, %v1308
      %v1702 = vsel %vm1676, %v1653, %v1310
      %v1704 = vsel %vm1676, %v1655, %v1312
      %v1706 = vsel %vm1676, %v1657, %v1314
      %v1708 = vsel %vm1676, %v1659, %v1316
      %v1710 = vsel %vm1676, %v1661, %v1318
      %v1712 = vsel %vm1676, %v1663, %v1320
      %v1714 = vsel %vm1676, %v1665, %v1322
      %v1716 = vsel %vm1676, %v1667, %v1324
      %v1718 = vsel %vm1676, %v1669, %v1326
      %v1720 = vsel %vm1676, %v1671, %v1328
      %v1722 = vsel %vm1676, %v1673, %v1330
      %v1724 = vsel %vm1676, %v1675, %v1332
      %v1725 = vld [vmem:[%s1] sm:$0xf]
      %v1726 = vld [vmem:[%s1 + $0x4] sm:$0xf]
      %v1727 = vld [vmem:[%s1 + $0x8] sm:$0xf]
      %v1728 = vld [vmem:[%s1 + $0xc] sm:$0xf]
      %v1729 = vld [vmem:[%s1 + $0x10] sm:$0xf]
      %v1730 = vld [vmem:[%s1 + $0x14] sm:$0xf]
      %v1731 = vld [vmem:[%s1 + $0x18] sm:$0xf]
      %v1732 = vld [vmem:[%s1 + $0x1c] sm:$0xf]
      %v1733 = vld [vmem:[%s1 + $0x20] sm:$0xf]
      %v1743 = vunpack.c.l.b16 %v1725
      %v1744 = vunpack.c.l.b16 %v1726
      %v1745 = vunpack.c.l.b16 %v1727
      %v1746 = vunpack.c.l.b16 %v1728
      %v1747 = vunpack.c.l.b16 %v1729
      %v1748 = vunpack.c.l.b16 %v1730
      %v1749 = vunpack.c.l.b16 %v1731
      %v1750 = vunpack.c.l.b16 %v1732
      %v1751 = vunpack.c.l.b16 %v1733
      %v1752 = vpack.c.b16 %v1744, %v1743
      %v1753 = vpack.c.b16 %v1746, %v1745
      %v1754 = vpack.c.b16 %v1748, %v1747
      %v1755 = vpack.c.b16 %v1750, %v1749
      %v1756 = vpack.c.b16 %v1751, %v1751
      %vm1761 = vcmask 588800
      %v1762 = vsel %vm1761, %v1678, 0
      %v1764 = vsel %vm1761, %v1680, 0
      %v1766 = vsel %vm1761, %v1682, 0
      %v1768 = vsel %vm1761, %v1684, 0
      %v1770 = vsel %vm1761, %v1686, 0
      %v1772 = vsel %vm1761, %v1688, 0
      %v1774 = vsel %vm1761, %v1690, 0
      %v1776 = vsel %vm1761, %v1692, 0
      %v1778 = vsel %vm1761, %v1694, 0
      %v1780 = vsel %vm1761, %v1696, 0
      %v1782 = vsel %vm1761, %v1698, 0
      %v1784 = vsel %vm1761, %v1700, 0
      %v1786 = vsel %vm1761, %v1702, 0
      %v1788 = vsel %vm1761, %v1704, 0
      %v1790 = vsel %vm1761, %v1706, 0
      %v1792 = vsel %vm1761, %v1708, 0
      %v1794 = vsel %vm1761, %v1710, 0
      %v1796 = vsel %vm1761, %v1712, 0
      %v1798 = vsel %vm1761, %v1714, 0
      %v1800 = vsel %vm1761, %v1716, 0
      %v1802 = vsel %vm1761, %v1718, 0
      %v1804 = vsel %vm1761, %v1720, 0
      %v1806 = vsel %vm1761, %v1722, 0
      %v1808 = vsel %vm1761, %v1724, 0
      %vm1810 = vcmask 1043456
      %v1812 = vsel %vm1810, %v1756, 0
      %1814 = vmatprep.subr.bf16.mxu0 0
      %1815 = vmatpush1.bf16.msra.mxu0 %v1752
      %1816 = vmatprep.subr.bf16.mxu0 0
      %1817 = vmatpush1.bf16.msra.mxu0 %v1753
      %1818 = vmatprep.subr.bf16.mxu0 0
      %1819 = vmatpush1.bf16.msra.mxu0 %v1754
      %1820 = vmatprep.subr.bf16.mxu0 0
      %1821 = vmatpush1.bf16.msra.mxu0 %v1755
      %1822 = vmatprep.subr.bf16.mxu0 0
      %1823 = vmatpush1.bf16.msra.mxu0 %v1812
      %1824 = vmatprep.subr.bf16.mxu0 0
      %1825 = vmatpush1.bf16.msra.mxu0 0
      %1826 = vmatprep.subr.bf16.mxu0 0
      %1827 = vmatpush1.bf16.msra.mxu0 0
      %1828 = vmatprep.subr.bf16.mxu0 0
      %1829 = vmatpush1.bf16.msra.mxu0 0
      %1830 = vmatprep.subr.bf16.mxu0 0
      %1831 = vmatpush1.bf16.msra.mxu0 0
      %1832 = vmatprep.subr.bf16.mxu0 0
      %1833 = vmatpush1.bf16.msra.mxu0 0
      %1834 = vmatprep.subr.bf16.mxu0 0
      %1835 = vmatpush1.bf16.msra.mxu0 0
      %1836 = vmatprep.subr.bf16.mxu0 0
      %1837 = vmatpush1.bf16.msra.mxu0 0
      %1838 = vmatprep.subr.bf16.mxu0 0
      %1839 = vmatpush1.bf16.msra.mxu0 0
      %1840 = vmatprep.subr.bf16.mxu0 0
      %1841 = vmatpush1.bf16.msra.mxu0 0
      %1842 = vmatprep.subr.bf16.mxu0 0
      %1843 = vmatpush1.bf16.msra.mxu0 0
      %1844 = vmatprep.subr.bf16.mxu0 0
      %1845 = vmatpush1.bf16.msra.mxu0 0
      %1846 = vmatprep.mubr.bf16.mxu0 0
      %1847 = vmatmul.mubr.bf16.gmra.mrb[0].mxu0 %v1762
      %v1848 = vpop.f32.mrb[0].mxu0
      %v1849 = vadd.f32 0.0, %v1848
      %v1850 = vpop.f32.mrb[0].mxu0
      %v1851 = vpop.f32.mrb[0].mxu0
      %v1852 = vadd.f32 0.0, %v1851
      %v1853 = vpop.f32.mrb[0].mxu0
      %1854 = vmatprep.mubr.bf16.mxu0 0
      %1855 = vmatmul.mubr.bf16.gmra.mrb[0].mxu0 %v1764
      %v1856 = vpop.f32.mrb[0].mxu0
      %v1857 = vadd.f32 0.0, %v1856
      %v1858 = vpop.f32.mrb[0].mxu0
      %v1859 = vpop.f32.mrb[0].mxu0
      %v1860 = vadd.f32 0.0, %v1859
      %v1861 = vpop.f32.mrb[0].mxu0
      %1862 = vmatprep.mubr.bf16.mxu0 0
      %1863 = vmatmul.mubr.bf16.gmra.mrb[0].mxu0 %v1766
      %v1864 = vpop.f32.mrb[0].mxu0
      %v1865 = vadd.f32 0.0, %v1864
      %v1866 = vpop.f32.mrb[0].mxu0
      %v1867 = vpop.f32.mrb[0].mxu0
      %v1868 = vadd.f32 0.0, %v1867
      %v1869 = vpop.f32.mrb[0].mxu0
      %1870 = vmatprep.mubr.bf16.mxu0 0
      %1871 = vmatmul.mubr.bf16.gmra.mrb[0].mxu0 %v1768
      %v1872 = vpop.f32.mrb[0].mxu0
      %v1873 = vadd.f32 0.0, %v1872
      %v1874 = vpop.f32.mrb[0].mxu0
      %v1875 = vpop.f32.mrb[0].mxu0
      %v1876 = vadd.f32 0.0, %v1875
      %v1877 = vpop.f32.mrb[0].mxu0
      %1878 = vmatprep.mubr.bf16.mxu0 0
      %1879 = vmatmul.mubr.bf16.gmra.mrb[0].mxu0 %v1770
      %v1880 = vpop.f32.mrb[0].mxu0
      %v1881 = vadd.f32 0.0, %v1880
      %v1882 = vpop.f32.mrb[0].mxu0
      %v1883 = vpop.f32.mrb[0].mxu0
      %v1884 = vadd.f32 0.0, %v1883
      %v1885 = vpop.f32.mrb[0].mxu0
      %1886 = vmatprep.mubr.bf16.mxu0 0
      %1887 = vmatmul.mubr.bf16.gmra.mrb[0].mxu0 %v1772
      %v1888 = vpop.f32.mrb[0].mxu0
      %v1889 = vadd.f32 0.0, %v1888
      %v1890 = vpop.f32.mrb[0].mxu0
      %v1891 = vpop.f32.mrb[0].mxu0
      %v1892 = vadd.f32 0.0, %v1891
      %v1893 = vpop.f32.mrb[0].mxu0
      %1894 = vmatprep.mubr.bf16.mxu0 0
      %1895 = vmatmul.mubr.bf16.gmra.mrb[0].mxu0 %v1774
      %v1896 = vpop.f32.mrb[0].mxu0
      %v1897 = vadd.f32 0.0, %v1896
      %v1898 = vpop.f32.mrb[0].mxu0
      %v1899 = vpop.f32.mrb[0].mxu0
      %v1900 = vadd.f32 0.0, %v1899
      %v1901 = vpop.f32.mrb[0].mxu0
      %1902 = vmatprep.mubr.bf16.mxu0 0
      %1903 = vmatmul.mubr.bf16.gmra.mrb[0].mxu0 %v1776
      %v1904 = vpop.f32.mrb[0].mxu0
      %v1905 = vadd.f32 0.0, %v1904
      %v1906 = vpop.f32.mrb[0].mxu0
      %v1907 = vpop.f32.mrb[0].mxu0
      %v1908 = vadd.f32 0.0, %v1907
      %v1909 = vpop.f32.mrb[0].mxu0
      %1910 = vmatprep.mubr.bf16.mxu0 0
      %1911 = vmatmul.mubr.bf16.gmra.mrb[0].mxu0 %v1778
      %v1912 = vpop.f32.mrb[0].mxu0
      %v1913 = vadd.f32 0.0, %v1912
      %v1914 = vpop.f32.mrb[0].mxu0
      %v1915 = vpop.f32.mrb[0].mxu0
      %v1916 = vadd.f32 0.0, %v1915
      %v1917 = vpop.f32.mrb[0].mxu0
      %1918 = vmatprep.mubr.bf16.mxu0 0
      %1919 = vmatmul.mubr.bf16.gmra.mrb[0].mxu0 %v1780
      %v1920 = vpop.f32.mrb[0].mxu0
      %v1921 = vadd.f32 0.0, %v1920
      %v1922 = vpop.f32.mrb[0].mxu0
      %v1923 = vpop.f32.mrb[0].mxu0
      %v1924 = vadd.f32 0.0, %v1923
      %v1925 = vpop.f32.mrb[0].mxu0
      %1926 = vmatprep.mubr.bf16.mxu0 0
      %1927 = vmatmul.mubr.bf16.gmra.mrb[0].mxu0 %v1782
      %v1928 = vpop.f32.mrb[0].mxu0
      %v1929 = vadd.f32 0.0, %v1928
      %v1930 = vpop.f32.mrb[0].mxu0
      %v1931 = vpop.f32.mrb[0].mxu0
      %v1932 = vadd.f32 0.0, %v1931
      %v1933 = vpop.f32.mrb[0].mxu0
      %1934 = vmatprep.mubr.bf16.mxu0 0
      %1935 = vmatmul.mubr.bf16.gmra.mrb[0].mxu0 %v1784
      %v1936 = vpop.f32.mrb[0].mxu0
      %v1937 = vadd.f32 0.0, %v1936
      %v1938 = vpop.f32.mrb[0].mxu0
      %v1939 = vpop.f32.mrb[0].mxu0
      %v1940 = vadd.f32 0.0, %v1939
      %v1941 = vpop.f32.mrb[0].mxu0
      %1942 = vmatprep.mubr.bf16.mxu0 0
      %1943 = vmatmul.mubr.bf16.gmra.mrb[0].mxu0 %v1786
      %v1944 = vpop.f32.mrb[0].mxu0
      %v1945 = vadd.f32 0.0, %v1944
      %v1946 = vpop.f32.mrb[0].mxu0
      %v1947 = vpop.f32.mrb[0].mxu0
      %v1948 = vadd.f32 0.0, %v1947
      %v1949 = vpop.f32.mrb[0].mxu0
      %1950 = vmatprep.mubr.bf16.mxu0 0
      %1951 = vmatmul.mubr.bf16.gmra.mrb[0].mxu0 %v1788
      %v1952 = vpop.f32.mrb[0].mxu0
      %v1953 = vadd.f32 0.0, %v1952
      %v1954 = vpop.f32.mrb[0].mxu0
      %v1955 = vpop.f32.mrb[0].mxu0
      %v1956 = vadd.f32 0.0, %v1955
      %v1957 = vpop.f32.mrb[0].mxu0
      %1958 = vmatprep.mubr.bf16.mxu0 0
      %1959 = vmatmul.mubr.bf16.gmra.mrb[0].mxu0 %v1790
      %v1960 = vpop.f32.mrb[0].mxu0
      %v1961 = vadd.f32 0.0, %v1960
      %v1962 = vpop.f32.mrb[0].mxu0
      %v1963 = vpop.f32.mrb[0].mxu0
      %v1964 = vadd.f32 0.0, %v1963
      %v1965 = vpop.f32.mrb[0].mxu0
      %1966 = vmatprep.mubr.bf16.mxu0 0
      %1967 = vmatmul.mubr.bf16.gmra.mrb[0].mxu0 %v1792
      %v1968 = vpop.f32.mrb[0].mxu0
      %v1969 = vadd.f32 0.0, %v1968
      %v1970 = vpop.f32.mrb[0].mxu0
      %v1971 = vpop.f32.mrb[0].mxu0
      %v1972 = vadd.f32 0.0, %v1971
      %v1973 = vpop.f32.mrb[0].mxu0
      %1974 = vmatprep.mubr.bf16.mxu0 0
      %1975 = vmatmul.mubr.bf16.gmra.mrb[0].mxu0 %v1794
      %v1976 = vpop.f32.mrb[0].mxu0
      %v1977 = vadd.f32 0.0, %v1976
      %v1978 = vpop.f32.mrb[0].mxu0
      %v1979 = vpop.f32.mrb[0].mxu0
      %v1980 = vadd.f32 0.0, %v1979
      %v1981 = vpop.f32.mrb[0].mxu0
      %1982 = vmatprep.mubr.bf16.mxu0 0
      %1983 = vmatmul.mubr.bf16.gmra.mrb[0].mxu0 %v1796
      %v1984 = vpop.f32.mrb[0].mxu0
      %v1985 = vadd.f32 0.0, %v1984
      %v1986 = vpop.f32.mrb[0].mxu0
      %v1987 = vpop.f32.mrb[0].mxu0
      %v1988 = vadd.f32 0.0, %v1987
      %v1989 = vpop.f32.mrb[0].mxu0
      %1990 = vmatprep.mubr.bf16.mxu0 0
      %1991 = vmatmul.mubr.bf16.gmra.mrb[0].mxu0 %v1798
      %v1992 = vpop.f32.mrb[0].mxu0
      %v1993 = vadd.f32 0.0, %v1992
      %v1994 = vpop.f32.mrb[0].mxu0
      %v1995 = vpop.f32.mrb[0].mxu0
      %v1996 = vadd.f32 0.0, %v1995
      %v1997 = vpop.f32.mrb[0].mxu0
      %1998 = vmatprep.mubr.bf16.mxu0 0
      %1999 = vmatmul.mubr.bf16.gmra.mrb[0].mxu0 %v1800
      %v2000 = vpop.f32.mrb[0].mxu0
      %v2001 = vadd.f32 0.0, %v2000
      %v2002 = vpop.f32.mrb[0].mxu0
      %v2003 = vpop.f32.mrb[0].mxu0
      %v2004 = vadd.f32 0.0, %v2003
      %v2005 = vpop.f32.mrb[0].mxu0
      %2006 = vmatprep.mubr.bf16.mxu0 0
      %2007 = vmatmul.mubr.bf16.gmra.mrb[0].mxu0 %v1802
      %v2008 = vpop.f32.mrb[0].mxu0
      %v2009 = vadd.f32 0.0, %v2008
      %v2010 = vpop.f32.mrb[0].mxu0
      %v2011 = vpop.f32.mrb[0].mxu0
      %v2012 = vadd.f32 0.0, %v2011
      %v2013 = vpop.f32.mrb[0].mxu0
      %2014 = vmatprep.mubr.bf16.mxu0 0
      %2015 = vmatmul.mubr.bf16.gmra.mrb[0].mxu0 %v1804
      %v2016 = vpop.f32.mrb[0].mxu0
      %v2017 = vadd.f32 0.0, %v2016
      %v2018 = vpop.f32.mrb[0].mxu0
      %v2019 = vpop.f32.mrb[0].mxu0
      %v2020 = vadd.f32 0.0, %v2019
      %v2021 = vpop.f32.mrb[0].mxu0
      %2022 = vmatprep.mubr.bf16.mxu0 0
      %2023 = vmatmul.mubr.bf16.gmra.mrb[0].mxu0 %v1806
      %v2024 = vpop.f32.mrb[0].mxu0
      %v2025 = vadd.f32 0.0, %v2024
      %v2026 = vpop.f32.mrb[0].mxu0
      %v2027 = vpop.f32.mrb[0].mxu0
      %v2028 = vadd.f32 0.0, %v2027
      %v2029 = vpop.f32.mrb[0].mxu0
      %2030 = vmatprep.mubr.bf16.mxu0 0
      %2031 = vmatmul.mubr.bf16.gmra.mrb[0].mxu0 %v1808
      %v2032 = vpop.f32.mrb[0].mxu0
      %v2033 = vadd.f32 0.0, %v2032
      %v2034 = vpop.f32.mrb[0].mxu0
      %v2035 = vpop.f32.mrb[0].mxu0
      %v2036 = vadd.f32 0.0, %v2035
      %v2037 = vpop.f32.mrb[0].mxu0
      %2038 = vdwg.mxu0
      %vm2039 = vcmp.ge.f32.partialorder %v1849, 0.0
      %vm2040 = vcmp.ge.f32.partialorder %v1852, 0.0
      %vm2041 = vcmp.ge.f32.partialorder %v1857, 0.0
      %vm2042 = vcmp.ge.f32.partialorder %v1860, 0.0
      %vm2043 = vcmp.ge.f32.partialorder %v1865, 0.0
      %vm2044 = vcmp.ge.f32.partialorder %v1868, 0.0
      %vm2045 = vcmp.ge.f32.partialorder %v1873, 0.0
      %vm2046 = vcmp.ge.f32.partialorder %v1876, 0.0
      %vm2047 = vcmp.ge.f32.partialorder %v1881, 0.0
      %vm2048 = vcmp.ge.f32.partialorder %v1884, 0.0
      %vm2049 = vcmp.ge.f32.partialorder %v1889, 0.0
      %vm2050 = vcmp.ge.f32.partialorder %v1892, 0.0
      %vm2051 = vcmp.ge.f32.partialorder %v1897, 0.0
      %vm2052 = vcmp.ge.f32.partialorder %v1900, 0.0
      %vm2053 = vcmp.ge.f32.partialorder %v1905, 0.0
      %vm2054 = vcmp.ge.f32.partialorder %v1908, 0.0
      %vm2055 = vcmp.ge.f32.partialorder %v1913, 0.0
      %vm2056 = vcmp.ge.f32.partialorder %v1916, 0.0
      %vm2057 = vcmp.ge.f32.partialorder %v1921, 0.0
      %vm2058 = vcmp.ge.f32.partialorder %v1924, 0.0
      %vm2059 = vcmp.ge.f32.partialorder %v1929, 0.0
      %vm2060 = vcmp.ge.f32.partialorder %v1932, 0.0
      %vm2061 = vcmp.ge.f32.partialorder %v1937, 0.0
      %vm2062 = vcmp.ge.f32.partialorder %v1940, 0.0
      %vm2063 = vcmp.ge.f32.partialorder %v1945, 0.0
      %vm2064 = vcmp.ge.f32.partialorder %v1948, 0.0
      %vm2065 = vcmp.ge.f32.partialorder %v1953, 0.0
      %vm2066 = vcmp.ge.f32.partialorder %v1956, 0.0
      %vm2067 = vcmp.ge.f32.partialorder %v1961, 0.0
      %vm2068 = vcmp.ge.f32.partialorder %v1964, 0.0
      %vm2069 = vcmp.ge.f32.partialorder %v1969, 0.0
      %vm2070 = vcmp.ge.f32.partialorder %v1972, 0.0
      %vm2071 = vcmp.ge.f32.partialorder %v1977, 0.0
      %vm2072 = vcmp.ge.f32.partialorder %v1980, 0.0
      %vm2073 = vcmp.ge.f32.partialorder %v1985, 0.0
      %vm2074 = vcmp.ge.f32.partialorder %v1988, 0.0
      %vm2075 = vcmp.ge.f32.partialorder %v1993, 0.0
      %vm2076 = vcmp.ge.f32.partialorder %v1996, 0.0
      %vm2077 = vcmp.ge.f32.partialorder %v2001, 0.0
      %vm2078 = vcmp.ge.f32.partialorder %v2004, 0.0
      %vm2079 = vcmp.ge.f32.partialorder %v2009, 0.0
      %vm2080 = vcmp.ge.f32.partialorder %v2012, 0.0
      %vm2081 = vcmp.ge.f32.partialorder %v2017, 0.0
      %vm2082 = vcmp.ge.f32.partialorder %v2020, 0.0
      %vm2083 = vcmp.ge.f32.partialorder %v2025, 0.0
      %vm2084 = vcmp.ge.f32.partialorder %v2028, 0.0
      %vm2085 = vcmp.ge.f32.partialorder %v2033, 0.0
      %vm2086 = vcmp.ge.f32.partialorder %v2036, 0.0
      %v2087 = vmul.f32 %v1849, 0.01
      %v2088 = vmul.f32 %v1852, 0.01
      %v2089 = vmul.f32 %v1857, 0.01
      %v2090 = vmul.f32 %v1860, 0.01
      %v2091 = vmul.f32 %v1865, 0.01
      %v2092 = vmul.f32 %v1868, 0.01
      %v2093 = vmul.f32 %v1873, 0.01
      %v2094 = vmul.f32 %v1876, 0.01
      %v2095 = vmul.f32 %v1881, 0.01
      %v2096 = vmul.f32 %v1884, 0.01
      %v2097 = vmul.f32 %v1889, 0.01
      %v2098 = vmul.f32 %v1892, 0.01
      %v2099 = vmul.f32 %v1897, 0.01
      %v2100 = vmul.f32 %v1900, 0.01
      %v2101 = vmul.f32 %v1905, 0.01
      %v2102 = vmul.f32 %v1908, 0.01
      %v2103 = vmul.f32 %v1913, 0.01
      %v2104 = vmul.f32 %v1916, 0.01
      %v2105 = vmul.f32 %v1921, 0.01
      %v2106 = vmul.f32 %v1924, 0.01
      %v2107 = vmul.f32 %v1929, 0.01
      %v2108 = vmul.f32 %v1932, 0.01
      %v2109 = vmul.f32 %v1937, 0.01
      %v2110 = vmul.f32 %v1940, 0.01
      %v2111 = vmul.f32 %v1945, 0.01
      %v2112 = vmul.f32 %v1948, 0.01
      %v2113 = vmul.f32 %v1953, 0.01
      %v2114 = vmul.f32 %v1956, 0.01
      %v2115 = vmul.f32 %v1961, 0.01
      %v2116 = vmul.f32 %v1964, 0.01
      %v2117 = vmul.f32 %v1969, 0.01
      %v2118 = vmul.f32 %v1972, 0.01
      %v2119 = vmul.f32 %v1977, 0.01
      %v2120 = vmul.f32 %v1980, 0.01
      %v2121 = vmul.f32 %v1985, 0.01
      %v2122 = vmul.f32 %v1988, 0.01
      %v2123 = vmul.f32 %v1993, 0.01
      %v2124 = vmul.f32 %v1996, 0.01
      %v2125 = vmul.f32 %v2001, 0.01
      %v2126 = vmul.f32 %v2004, 0.01
      %v2127 = vmul.f32 %v2009, 0.01
      %v2128 = vmul.f32 %v2012, 0.01
      %v2129 = vmul.f32 %v2017, 0.01
      %v2130 = vmul.f32 %v2020, 0.01
      %v2131 = vmul.f32 %v2025, 0.01
      %v2132 = vmul.f32 %v2028, 0.01
      %v2133 = vmul.f32 %v2033, 0.01
      %v2134 = vmul.f32 %v2036, 0.01
      %v2135 = vsel %vm2039, %v1849, %v2087
      %v2136 = vsel %vm2040, %v1852, %v2088
      %v2137 = vsel %vm2041, %v1857, %v2089
      %v2138 = vsel %vm2042, %v1860, %v2090
      %v2139 = vsel %vm2043, %v1865, %v2091
      %v2140 = vsel %vm2044, %v1868, %v2092
      %v2141 = vsel %vm2045, %v1873, %v2093
      %v2142 = vsel %vm2046, %v1876, %v2094
      %v2143 = vsel %vm2047, %v1881, %v2095
      %v2144 = vsel %vm2048, %v1884, %v2096
      %v2145 = vsel %vm2049, %v1889, %v2097
      %v2146 = vsel %vm2050, %v1892, %v2098
      %v2147 = vsel %vm2051, %v1897, %v2099
      %v2148 = vsel %vm2052, %v1900, %v2100
      %v2149 = vsel %vm2053, %v1905, %v2101
      %v2150 = vsel %vm2054, %v1908, %v2102
      %v2151 = vsel %vm2055, %v1913, %v2103
      %v2152 = vsel %vm2056, %v1916, %v2104
      %v2153 = vsel %vm2057, %v1921, %v2105
      %v2154 = vsel %vm2058, %v1924, %v2106
      %v2155 = vsel %vm2059, %v1929, %v2107
      %v2156 = vsel %vm2060, %v1932, %v2108
      %v2157 = vsel %vm2061, %v1937, %v2109
      %v2158 = vsel %vm2062, %v1940, %v2110
      %v2159 = vsel %vm2063, %v1945, %v2111
      %v2160 = vsel %vm2064, %v1948, %v2112
      %v2161 = vsel %vm2065, %v1953, %v2113
      %v2162 = vsel %vm2066, %v1956, %v2114
      %v2163 = vsel %vm2067, %v1961, %v2115
      %v2164 = vsel %vm2068, %v1964, %v2116
      %v2165 = vsel %vm2069, %v1969, %v2117
      %v2166 = vsel %vm2070, %v1972, %v2118
      %v2167 = vsel %vm2071, %v1977, %v2119
      %v2168 = vsel %vm2072, %v1980, %v2120
      %v2169 = vsel %vm2073, %v1985, %v2121
      %v2170 = vsel %vm2074, %v1988, %v2122
      %v2171 = vsel %vm2075, %v1993, %v2123
      %v2172 = vsel %vm2076, %v1996, %v2124
      %v2173 = vsel %vm2077, %v2001, %v2125
      %v2174 = vsel %vm2078, %v2004, %v2126
      %v2175 = vsel %vm2079, %v2009, %v2127
      %v2176 = vsel %vm2080, %v2012, %v2128
      %v2177 = vsel %vm2081, %v2017, %v2129
      %v2178 = vsel %vm2082, %v2020, %v2130
      %v2179 = vsel %vm2083, %v2025, %v2131
      %v2180 = vsel %vm2084, %v2028, %v2132
      %v2181 = vsel %vm2085, %v2033, %v2133
      %v2182 = vsel %vm2086, %v2036, %v2134
      %2183 = vst [vmem:[%s179] sm:$0xff] %v2135
      %2184 = vst [vmem:[%s179 + $0x8] sm:$0xff] %v2136
      %2185 = vst [vmem:[%s179 + $0x10] sm:$0xff] %v2137
      %2186 = vst [vmem:[%s179 + $0x18] sm:$0xff] %v2138
      %2187 = vst [vmem:[%s179 + $0x20] sm:$0xff] %v2139
      %2188 = vst [vmem:[%s179 + $0x28] sm:$0xff] %v2140
      %2189 = vst [vmem:[%s179 + $0x30] sm:$0xff] %v2141
      %2190 = vst [vmem:[%s179 + $0x38] sm:$0xff] %v2142
      %2191 = vst [vmem:[%s179 + $0x40] sm:$0xff] %v2143
      %2192 = vst [vmem:[%s179 + $0x48] sm:$0xff] %v2144
      %2193 = vst [vmem:[%s179 + $0x50] sm:$0xff] %v2145
      %2194 = vst [vmem:[%s179 + $0x58] sm:$0xff] %v2146
      %2195 = vst [vmem:[%s179 + $0x60] sm:$0xff] %v2147
      %2196 = vst [vmem:[%s179 + $0x68] sm:$0xff] %v2148
      %2197 = vst [vmem:[%s179 + $0x70] sm:$0xff] %v2149
      %2198 = vst [vmem:[%s179 + $0x78] sm:$0xff] %v2150
      %2199 = vst [vmem:[%s179 + $0x80] sm:$0xff] %v2151
      %2200 = vst [vmem:[%s179 + $0x88] sm:$0xff] %v2152
      %2201 = vst [vmem:[%s179 + $0x90] sm:$0xff] %v2153
      %2202 = vst [vmem:[%s179 + $0x98] sm:$0xff] %v2154
      %2203 = vst [vmem:[%s179 + $0xa0] sm:$0xff] %v2155
      %2204 = vst [vmem:[%s179 + $0xa8] sm:$0xff] %v2156
      %2205 = vst [vmem:[%s179 + $0xb0] sm:$0xff] %v2157
      %2206 = vst [vmem:[%s179 + $0xb8] sm:$0xff] %v2158
      %2207 = vst [vmem:[%s179 + $0xc0] sm:$0xff] %v2159
      %2208 = vst [vmem:[%s179 + $0xc8] sm:$0xff] %v2160
      %2209 = vst [vmem:[%s179 + $0xd0] sm:$0xff] %v2161
      %2210 = vst [vmem:[%s179 + $0xd8] sm:$0xff] %v2162
      %2211 = vst [vmem:[%s179 + $0xe0] sm:$0xff] %v2163
      %2212 = vst [vmem:[%s179 + $0xe8] sm:$0xff] %v2164
      %2213 = vst [vmem:[%s179 + $0xf0] sm:$0xff] %v2165
      %2214 = vst [vmem:[%s179 + $0xf8] sm:$0xff] %v2166
      %2215 = vst [vmem:[%s179 + $0x100] sm:$0xff] %v2167
      %2216 = vst [vmem:[%s179 + $0x108] sm:$0xff] %v2168
      %2217 = vst [vmem:[%s179 + $0x110] sm:$0xff] %v2169
      %2218 = vst [vmem:[%s179 + $0x118] sm:$0xff] %v2170
      %2219 = vst [vmem:[%s179 + $0x120] sm:$0xff] %v2171
      %2220 = vst [vmem:[%s179 + $0x128] sm:$0xff] %v2172
      %2221 = vst [vmem:[%s179 + $0x130] sm:$0xff] %v2173
      %2222 = vst [vmem:[%s179 + $0x138] sm:$0xff] %v2174
      %2223 = vst [vmem:[%s179 + $0x140] sm:$0xff] %v2175
      %2224 = vst [vmem:[%s179 + $0x148] sm:$0xff] %v2176
      %2225 = vst [vmem:[%s179 + $0x150] sm:$0xff] %v2177
      %2226 = vst [vmem:[%s179 + $0x158] sm:$0xff] %v2178
      %2227 = vst [vmem:[%s179 + $0x160] sm:$0xff] %v2179
      %2228 = vst [vmem:[%s179 + $0x168] sm:$0xff] %v2180
      %2229 = vst [vmem:[%s179 + $0x170] sm:$0xff] %v2181
      %2230 = vst [vmem:[%s179 + $0x178] sm:$0xff] %v2182
      %p2231 = scmp.lt.s32.totalorder %s17, 1
      %s2232 = scalar_select %p2231, %s17, 1
      %p2233 = scmp.lt.s32.totalorder %s18, 0
      %s2234 = scalar_select %p2233, %s18, 0
      %s2235 = smul.addr %s2234, 48
      %s2236 = smul.addr %s2232, 48
      %s2237 = sadd.s32 %s2235, %s2236
      %s2238 = smul.addr %s2237, 8
      %s2239 = scalar_lea.vmem %s2, %s2238
      // Predicated region
      $region29: #{basic_conv2d.1} parent=27 // pred_check
        %p2240 = pneg %p94
      $region30: #{basic_conv2d.1} parent=27 // pred_check_branch
        %2242 = sbr.rel (%p2240) target = $region32
      $region31: #{basic_conv2d.1} parent=27 // pred_region
        _
      $region32: #{basic_conv2d.1} parent=27 // pred_fallthru
        _
    $region28: #{basic_conv2d.1} parent=5 // pred_fallthru
      _
    %p2243 = scmp.le.s32.totalorder 2, %s8
    // Predicated region
    $region33: #{basic_conv2d.1} parent=5 // pred_check
      %p2244 = pneg %p2243
    $region34: #{basic_conv2d.1} parent=5 // pred_check_branch
      %2246 = sbr.rel (%p2244) target = $region36
    $region35: #{basic_conv2d.1} parent=5 // pred_region
      %s2247 = ssub.s32 %s8, 2
      // Predicated region
      $region37: #{basic_conv2d.1} parent=35 // pred_check
        %p2248 = pneg %p100
      $region38: #{basic_conv2d.1} parent=35 // pred_check_branch
        %2250 = sbr.rel (%p2248) target = $region40
      $region39: #{basic_conv2d.1} parent=35 // pred_region
        %p2251 = scmp.lt.s32.totalorder %s19, 1
        %s2252 = scalar_select %p2251, %s19, 1
        %p2253 = scmp.lt.s32.totalorder %s20, 0
        %s2254 = scalar_select %p2253, %s20, 0
        %s2255 = smul.addr %s2254, 48
        %s2256 = smul.addr %s2252, 48
        %s2257 = sadd.s32 %s2255, %s2256
        %s2258 = smul.addr %s2257, 8
        %s2259 = scalar_lea.vmem %s2, %s2258
      $region40: #{basic_conv2d.1} parent=35 // pred_fallthru
        _
    $region36: #{basic_conv2d.1} parent=5 // pred_fallthru
      _
  $region6: #{basic_conv2d.1} parent=0 // loop_footer
    %s12 = sadd.s32 1, %s8
  $region7: #{basic_conv2d.1} parent=0 // loop_footer_branch
    %7 = sbr.rel target = $region3
  $region8: #{basic_conv2d.1} parent=0 // loop_exit
    _

</llo_original>
